<compile_context>
chip_gen: v7x
topology: tpu7x:2x2x1
jax: 0.10.0
libtpu: 0.0.40
codegen_flags: <defaults>
</compile_context>

<pallas_src>
import functools
import math

import jax
import jax.numpy as jnp
from jax.experimental import pallas as pl
from jax.experimental.pallas import tpu as pltpu


# Fixed feature-extractor architecture (see TODO above).
KSIZE = 3
STRIDE = 2
OC1 = 8
OC2 = 16
H1, H2 = 400, 100        # MLP head widths (module spec)
LANE = 128


def conv_out(n):
    return (n - KSIZE) // STRIDE + 1


def _rup(x, m):
    return ((x + m - 1) // m) * m


# ----------------------------------------------------------------------------
# Fused Pallas kernel: the whole forward is 5 batched MXU dots + ReLUs on a
# TB-row tile.  All operands are lane-dense and zero-padded to multiples of
# 128 (padding is numerically inert: padded columns get zero bias, ReLU(0)=0,
# and the corresponding downstream weight rows are zero).
# ----------------------------------------------------------------------------
def _critic_image_kernel(x_ref, u_ref,
                         m1_ref, bc1_ref, m2_ref, bc2_ref,
                         w1f_ref, w1a_ref, b1_ref,
                         w2_ref, b2_ref, w3_ref, b3_ref,
                         o_ref):
    f32 = jnp.float32
    # conv1 as matmul: (TB, Dp) @ (Dp, N1P) -> ReLU
    f1 = jnp.dot(x_ref[...], m1_ref[...], preferred_element_type=f32) + bc1_ref[...]
    f1 = jnp.maximum(f1, 0.0)
    # conv2 as matmul: (TB, N1P) @ (N1P, N2P) -> ReLU
    f2 = jnp.dot(f1, m2_ref[...], preferred_element_type=f32) + bc2_ref[...]
    f2 = jnp.maximum(f2, 0.0)
    # fc1 (concat-free: feature part + action part)
    h1 = (jnp.dot(f2, w1f_ref[...], preferred_element_type=f32)
          + jnp.dot(u_ref[...], w1a_ref[...], preferred_element_type=f32)
          + b1_ref[...])
    h1 = jnp.maximum(h1, 0.0)
    # fc2
    h2 = jnp.dot(h1, w2_ref[...], preferred_element_type=f32) + b2_ref[...]
    h2 = jnp.maximum(h2, 0.0)
    # fc3 -- output kept as a 128-lane padded block; column 0 is the q-value
    o_ref[...] = jnp.dot(h2, w3_ref[...], preferred_element_type=f32) + b3_ref[...]


# ----------------------------------------------------------------------------
# Parameter init (canonical torch-like layout)
# ----------------------------------------------------------------------------
def _uniform(key, shape, bound):
    return jax.random.uniform(key, shape, jnp.float32, -bound, bound)


def init_params(key, in_ch, action_dim, h, w):
    ks = jax.random.split(key, 10)
    c1_fan = in_ch * KSIZE * KSIZE
    c2_fan = OC1 * KSIZE * KSIZE
    conv1_w = _uniform(ks[0], (OC1, in_ch, KSIZE, KSIZE), 1.0 / math.sqrt(c1_fan))
    conv1_b = _uniform(ks[1], (OC1,), 1.0 / math.sqrt(c1_fan))
    conv2_w = _uniform(ks[2], (OC2, OC1, KSIZE, KSIZE), 1.0 / math.sqrt(c2_fan))
    conv2_b = _uniform(ks[3], (OC2,), 1.0 / math.sqrt(c2_fan))

    oh1, ow1 = conv_out(h), conv_out(w)
    oh2, ow2 = conv_out(oh1), conv_out(ow1)
    latent_dim = OC2 * oh2 * ow2

    d_in = latent_dim + action_dim
    w1 = _uniform(ks[4], (d_in, H1), 1.0 / math.sqrt(d_in))
    b1 = _uniform(ks[5], (H1,), 1.0 / math.sqrt(d_in))
    w2 = _uniform(ks[6], (H1, H2), 1.0 / math.sqrt(H1))
    b2 = _uniform(ks[7], (H2,), 1.0 / math.sqrt(H1))
    w3 = _uniform(ks[8], (H2, 1), 1.0 / math.sqrt(H2))
    b3 = _uniform(ks[9], (1,), 1.0 / math.sqrt(H2))
    return dict(conv1_w=conv1_w, conv1_b=conv1_b,
                conv2_w=conv2_w, conv2_b=conv2_b,
                w1=w1, b1=b1, w2=w2, b2=b2, w3=w3, b3=b3)


# ----------------------------------------------------------------------------
# One-time kernel-layout prep: conv -> dense matmul matrices, lane padding
# ----------------------------------------------------------------------------
def _conv_as_matmul(conv_w, in_shape):
    """Dense (Cin*H*W, OC*OH*OW) matrix M such that flatten(conv(x)) == x_flat @ M
    for a VALID, stride-2, NCHW/OIHW conv.  Built once by pushing the identity
    basis through the conv (host-side, outside the per-forward path)."""
    c, h, w = in_shape
    n = c * h * w
    eye = jnp.eye(n, dtype=jnp.float32).reshape(n, c, h, w)
    out = jax.lax.conv_general_dilated(
        eye, conv_w, (STRIDE, STRIDE), "VALID",
        dimension_numbers=("NCHW", "OIHW", "NCHW"))
    return out.reshape(n, -1)


def prepare_kernel_params(params, in_ch, action_dim, h, w):
    oh1, ow1 = conv_out(h), conv_out(w)
    oh2, ow2 = conv_out(oh1), conv_out(ow1)
    n0 = in_ch * h * w
    n1 = OC1 * oh1 * ow1
    n2 = OC2 * oh2 * ow2                  # latent_dim, torch NCHW flatten order

    n0p, n1p, n2p = _rup(n0, LANE), _rup(n1, LANE), _rup(n2, LANE)
    h1p, h2p, outp = _rup(H1, LANE), _rup(H2, LANE), LANE

    m1 = _conv_as_matmul(params["conv1_w"], (in_ch, h, w))      # (n0, n1)
    m2 = _conv_as_matmul(params["conv2_w"], (OC1, oh1, ow1))    # (n1, n2)
    m1 = jnp.pad(m1, ((0, n0p - n0), (0, n1p - n1)))
    m2 = jnp.pad(m2, ((0, n1p - n1), (0, n2p - n2)))
    bc1 = jnp.pad(jnp.repeat(params["conv1_b"], oh1 * ow1),
                  (0, n1p - n1)).reshape(1, n1p)
    bc2 = jnp.pad(jnp.repeat(params["conv2_b"], oh2 * ow2),
                  (0, n2p - n2)).reshape(1, n2p)

    w1 = params["w1"]                                            # (n2 + A, H1)
    w1f = jnp.pad(w1[:n2], ((0, n2p - n2), (0, h1p - H1)))       # (n2p, h1p)
    w1a = jnp.pad(w1[n2:], ((0, 0), (0, h1p - H1)))              # (A, h1p)
    b1 = jnp.pad(params["b1"], (0, h1p - H1)).reshape(1, h1p)
    w2 = jnp.pad(params["w2"], ((0, h1p - H1), (0, h2p - H2)))   # (h1p, h2p)
    b2 = jnp.pad(params["b2"], (0, h2p - H2)).reshape(1, h2p)
    w3 = jnp.pad(params["w3"], ((0, h2p - H2), (0, outp - 1)))   # (h2p, 128)
    b3 = jnp.pad(params["b3"], (0, outp - 1)).reshape(1, outp)
    return dict(m1=m1, bc1=bc1, m2=m2, bc2=bc2,
                w1f=w1f, w1a=w1a, b1=b1, w2=w2, b2=b2, w3=w3, b3=b3)


# ----------------------------------------------------------------------------
# CriticImage forward: one fused pallas_call, batch-tiled grid
# ----------------------------------------------------------------------------
@functools.partial(jax.jit, static_argnames=("tb",))
def critic_image_forward(kp, x, u, tb=128):
    B, C, Hh, Ww = x.shape
    A = u.shape[1]
    D = C * Hh * Ww
    Dp = kp["m1"].shape[0]
    n1p = kp["m2"].shape[0]
    n2p = kp["w1f"].shape[0]
    h1p = kp["w2"].shape[0]
    h2p = kp["w3"].shape[0]
    outp = kp["w3"].shape[1]

    # Batch tile: up to `tb` rows per grid step, padded so TB | Bp and TB % 8 == 0.
    TB = min(tb, _rup(B, 8))
    Bp = _rup(B, TB)

    # Lane-dense flattened image (torch NCHW flatten order) + zero padding.
    x_flat = jnp.pad(x.reshape(B, D), ((0, Bp - B), (0, Dp - D)))
    u_p = jnp.pad(u, ((0, Bp - B), (0, 0)))

    const = lambda b: (0, 0)
    q = pl.pallas_call(
        _critic_image_kernel,
        out_shape=jax.ShapeDtypeStruct((Bp, outp), jnp.float32),
        grid=(Bp // TB,),
        in_specs=[
            pl.BlockSpec((TB, Dp), lambda b: (b, 0)),   # image tile
            pl.BlockSpec((TB, A), lambda b: (b, 0)),    # action tile
            pl.BlockSpec((Dp, n1p), const),             # conv1 as matmul
            pl.BlockSpec((1, n1p), const),              # conv1 bias (per-position)
            pl.BlockSpec((n1p, n2p), const),            # conv2 as matmul
            pl.BlockSpec((1, n2p), const),              # conv2 bias (per-position)
            pl.BlockSpec((n2p, h1p), const),            # W1 feature part
            pl.BlockSpec((A, h1p), const),              # W1 action part
            pl.BlockSpec((1, h1p), const),              # b1
            pl.BlockSpec((h1p, h2p), const),            # W2
            pl.BlockSpec((1, h2p), const),              # b2
            pl.BlockSpec((h2p, outp), const),           # W3 (padded to 128 lanes)
            pl.BlockSpec((1, outp), const),             # b3
        ],
        out_specs=pl.BlockSpec((TB, outp), lambda b: (b, 0)),
        compiler_params=pltpu.CompilerParams(
            dimension_semantics=("parallel",),
            vmem_limit_bytes=32 * 1024 * 1024),
    )(x_flat, u_p,
      kp["m1"], kp["bc1"], kp["m2"], kp["bc2"],
      kp["w1f"], kp["w1a"], kp["b1"],
      kp["w2"], kp["b2"], kp["w3"], kp["b3"])
    return q[:B, :1]


if __name__ == "__main__":
    key = jax.random.PRNGKey(0)
    B, C, H, W = 2, 4, 16, 16
    ACTION_DIM = 4

    kparam_key, kx, ku = jax.random.split(key, 3)
    params = init_params(kparam_key, C, ACTION_DIM, H, W)
    kparams = prepare_kernel_params(params, C, ACTION_DIM, H, W)

    x = jax.random.normal(kx, (B, C, H, W), jnp.float32)
    u = jax.random.normal(ku, (B, ACTION_DIM), jnp.float32)

    q = critic_image_forward(kparams, x, u)
    q = jax.block_until_ready(q)
    assert q.shape == (B, 1), q.shape

    # Plain-JAX reference (torch-equivalent semantics) to validate the kernel.
    def ref_forward(p, x, u):
        f = jax.lax.conv_general_dilated(
            x, p["conv1_w"], (STRIDE, STRIDE), "VALID",
            dimension_numbers=("NCHW", "OIHW", "NCHW"))
        f = jnp.maximum(f + p["conv1_b"][None, :, None, None], 0.0)
        f = jax.lax.conv_general_dilated(
            f, p["conv2_w"], (STRIDE, STRIDE), "VALID",
            dimension_numbers=("NCHW", "OIHW", "NCHW"))
        f = jnp.maximum(f + p["conv2_b"][None, :, None, None], 0.0)
        f = f.reshape(x.shape[0], -1)
        xu = jnp.concatenate([f, u], axis=1)
        h1 = jnp.maximum(xu @ p["w1"] + p["b1"], 0.0)
        h2 = jnp.maximum(h1 @ p["w2"] + p["b2"], 0.0)
        return h2 @ p["w3"] + p["b3"]

    q_ref = ref_forward(params, x, u)
    assert jnp.allclose(q, q_ref, atol=2e-3, rtol=2e-3), (q, q_ref)

    print("KERNEL_OK")
</pallas_src>

<mosaic_0001>
module attributes {stable_mosaic.version = 11 : i64} {
  func.func @_critic_image_kernel(%arg0: i32, %arg1: memref<8x1024xf32, #tpu.memory_space<vmem>>, %arg2: memref<8x4xf32, #tpu.memory_space<vmem>>, %arg3: memref<1024x512xf32, #tpu.memory_space<vmem>>, %arg4: memref<1x512xf32, #tpu.memory_space<vmem>>, %arg5: memref<512x256xf32, #tpu.memory_space<vmem>>, %arg6: memref<1x256xf32, #tpu.memory_space<vmem>>, %arg7: memref<256x512xf32, #tpu.memory_space<vmem>>, %arg8: memref<4x512xf32, #tpu.memory_space<vmem>>, %arg9: memref<1x512xf32, #tpu.memory_space<vmem>>, %arg10: memref<512x128xf32, #tpu.memory_space<vmem>>, %arg11: memref<1x128xf32, #tpu.memory_space<vmem>>, %arg12: memref<128x128xf32, #tpu.memory_space<vmem>>, %arg13: memref<1x128xf32, #tpu.memory_space<vmem>>, %arg14: memref<8x128xf32, #tpu.memory_space<vmem>>) attributes {dimension_semantics = [#tpu.dimension_semantics<parallel>], iteration_bounds = array<i64: 1>, scalar_prefetch = 0 : i64, scratch_operands = 0 : i64, tpu.core_type = #tpu.core_type<tc>, window_params = [{transform_indices = @transform_0, window_bounds = array<i64: 8, 1024>}, {transform_indices = @transform_1, window_bounds = array<i64: 8, 4>}, {pipeline_mode = #tpu.pipeline_mode<synchronous>, transform_indices = @transform_2, window_bounds = array<i64: 1024, 512>}, {pipeline_mode = #tpu.pipeline_mode<synchronous>, transform_indices = @transform_3, window_bounds = array<i64: 1, 512>}, {pipeline_mode = #tpu.pipeline_mode<synchronous>, transform_indices = @transform_4, window_bounds = array<i64: 512, 256>}, {pipeline_mode = #tpu.pipeline_mode<synchronous>, transform_indices = @transform_5, window_bounds = array<i64: 1, 256>}, {pipeline_mode = #tpu.pipeline_mode<synchronous>, transform_indices = @transform_6, window_bounds = array<i64: 256, 512>}, {pipeline_mode = #tpu.pipeline_mode<synchronous>, transform_indices = @transform_7, window_bounds = array<i64: 4, 512>}, {pipeline_mode = #tpu.pipeline_mode<synchronous>, transform_indices = @transform_8, window_bounds = array<i64: 1, 512>}, {pipeline_mode = #tpu.pipeline_mode<synchronous>, transform_indices = @transform_9, window_bounds = array<i64: 512, 128>}, {pipeline_mode = #tpu.pipeline_mode<synchronous>, transform_indices = @transform_10, window_bounds = array<i64: 1, 128>}, {pipeline_mode = #tpu.pipeline_mode<synchronous>, transform_indices = @transform_11, window_bounds = array<i64: 128, 128>}, {pipeline_mode = #tpu.pipeline_mode<synchronous>, transform_indices = @transform_12, window_bounds = array<i64: 1, 128>}, {transform_indices = @transform_13, window_bounds = array<i64: 8, 128>}]} {
    %c0 = arith.constant 0 : index
    %c0_0 = arith.constant 0 : index
    %0 = vector.load %arg1[%c0, %c0_0] : memref<8x1024xf32, #tpu.memory_space<vmem>>, vector<8x1024xf32>
    %c0_1 = arith.constant 0 : index
    %c0_2 = arith.constant 0 : index
    %1 = vector.load %arg3[%c0_1, %c0_2] : memref<1024x512xf32, #tpu.memory_space<vmem>>, vector<1024x512xf32>
    %cst = arith.constant dense<0.000000e+00> : vector<8x512xf32>
    %2 = tpu.matmul %0, %1, %cst {dimension_numbers = #tpu.dot_dimension_numbers<[1], [0], [0], [1], [0, 0, 1, 1], [], []>} : vector<8x1024xf32>, vector<1024x512xf32>, vector<8x512xf32> -> vector<8x512xf32>
    %c0_3 = arith.constant 0 : index
    %c0_4 = arith.constant 0 : index
    %3 = vector.load %arg4[%c0_3, %c0_4] : memref<1x512xf32, #tpu.memory_space<vmem>>, vector<1x512xf32>
    %4 = vector.broadcast %3 : vector<1x512xf32> to vector<8x512xf32>
    %5 = arith.addf %2, %4 : vector<8x512xf32>
    %cst_5 = arith.constant 0.000000e+00 : f32
    %6 = vector.broadcast %cst_5 : f32 to vector<8x512xf32>
    %7 = arith.maximumf %5, %6 : vector<8x512xf32>
    %c0_6 = arith.constant 0 : index
    %c0_7 = arith.constant 0 : index
    %8 = vector.load %arg5[%c0_6, %c0_7] : memref<512x256xf32, #tpu.memory_space<vmem>>, vector<512x256xf32>
    %cst_8 = arith.constant dense<0.000000e+00> : vector<8x256xf32>
    %9 = tpu.matmul %7, %8, %cst_8 {dimension_numbers = #tpu.dot_dimension_numbers<[1], [0], [0], [1], [0, 0, 1, 1], [], []>} : vector<8x512xf32>, vector<512x256xf32>, vector<8x256xf32> -> vector<8x256xf32>
    %c0_9 = arith.constant 0 : index
    %c0_10 = arith.constant 0 : index
    %10 = vector.load %arg6[%c0_9, %c0_10] : memref<1x256xf32, #tpu.memory_space<vmem>>, vector<1x256xf32>
    %11 = vector.broadcast %10 : vector<1x256xf32> to vector<8x256xf32>
    %12 = arith.addf %9, %11 : vector<8x256xf32>
    %cst_11 = arith.constant 0.000000e+00 : f32
    %13 = vector.broadcast %cst_11 : f32 to vector<8x256xf32>
    %14 = arith.maximumf %12, %13 : vector<8x256xf32>
    %c0_12 = arith.constant 0 : index
    %c0_13 = arith.constant 0 : index
    %15 = vector.load %arg7[%c0_12, %c0_13] : memref<256x512xf32, #tpu.memory_space<vmem>>, vector<256x512xf32>
    %cst_14 = arith.constant dense<0.000000e+00> : vector<8x512xf32>
    %16 = tpu.matmul %14, %15, %cst_14 {dimension_numbers = #tpu.dot_dimension_numbers<[1], [0], [0], [1], [0, 0, 1, 1], [], []>} : vector<8x256xf32>, vector<256x512xf32>, vector<8x512xf32> -> vector<8x512xf32>
    %c0_15 = arith.constant 0 : index
    %c0_16 = arith.constant 0 : index
    %17 = vector.load %arg2[%c0_15, %c0_16] : memref<8x4xf32, #tpu.memory_space<vmem>>, vector<8x4xf32>
    %c0_17 = arith.constant 0 : index
    %c0_18 = arith.constant 0 : index
    %18 = vector.load %arg8[%c0_17, %c0_18] : memref<4x512xf32, #tpu.memory_space<vmem>>, vector<4x512xf32>
    %cst_19 = arith.constant dense<0.000000e+00> : vector<8x512xf32>
    %19 = tpu.matmul %17, %18, %cst_19 {dimension_numbers = #tpu.dot_dimension_numbers<[1], [0], [0], [1], [0, 0, 1, 1], [], []>} : vector<8x4xf32>, vector<4x512xf32>, vector<8x512xf32> -> vector<8x512xf32>
    %20 = arith.addf %16, %19 : vector<8x512xf32>
    %c0_20 = arith.constant 0 : index
    %c0_21 = arith.constant 0 : index
    %21 = vector.load %arg9[%c0_20, %c0_21] : memref<1x512xf32, #tpu.memory_space<vmem>>, vector<1x512xf32>
    %22 = vector.broadcast %21 : vector<1x512xf32> to vector<8x512xf32>
    %23 = arith.addf %20, %22 : vector<8x512xf32>
    %cst_22 = arith.constant 0.000000e+00 : f32
    %24 = vector.broadcast %cst_22 : f32 to vector<8x512xf32>
    %25 = arith.maximumf %23, %24 : vector<8x512xf32>
    %c0_23 = arith.constant 0 : index
    %c0_24 = arith.constant 0 : index
    %26 = vector.load %arg10[%c0_23, %c0_24] : memref<512x128xf32, #tpu.memory_space<vmem>>, vector<512x128xf32>
    %cst_25 = arith.constant dense<0.000000e+00> : vector<8x128xf32>
    %27 = tpu.matmul %25, %26, %cst_25 {dimension_numbers = #tpu.dot_dimension_numbers<[1], [0], [0], [1], [0, 0, 1, 1], [], []>} : vector<8x512xf32>, vector<512x128xf32>, vector<8x128xf32> -> vector<8x128xf32>
    %c0_26 = arith.constant 0 : index
    %c0_27 = arith.constant 0 : index
    %28 = vector.load %arg11[%c0_26, %c0_27] : memref<1x128xf32, #tpu.memory_space<vmem>>, vector<1x128xf32>
    %29 = vector.broadcast %28 : vector<1x128xf32> to vector<8x128xf32>
    %30 = arith.addf %27, %29 : vector<8x128xf32>
    %cst_28 = arith.constant 0.000000e+00 : f32
    %31 = vector.broadcast %cst_28 : f32 to vector<8x128xf32>
    %32 = arith.maximumf %30, %31 : vector<8x128xf32>
    %c0_29 = arith.constant 0 : index
    %c0_30 = arith.constant 0 : index
    %33 = vector.load %arg12[%c0_29, %c0_30] : memref<128x128xf32, #tpu.memory_space<vmem>>, vector<128x128xf32>
    %cst_31 = arith.constant dense<0.000000e+00> : vector<8x128xf32>
    %34 = tpu.matmul %32, %33, %cst_31 {dimension_numbers = #tpu.dot_dimension_numbers<[1], [0], [0], [1], [0, 0, 1, 1], [], []>} : vector<8x128xf32>, vector<128x128xf32>, vector<8x128xf32> -> vector<8x128xf32>
    %c0_32 = arith.constant 0 : index
    %c0_33 = arith.constant 0 : index
    %35 = vector.load %arg13[%c0_32, %c0_33] : memref<1x128xf32, #tpu.memory_space<vmem>>, vector<1x128xf32>
    %36 = vector.broadcast %35 : vector<1x128xf32> to vector<8x128xf32>
    %37 = arith.addf %34, %36 : vector<8x128xf32>
    %c0_34 = arith.constant 0 : index
    %c0_35 = arith.constant 0 : index
    %38 = vector.load %arg14[%c0_34, %c0_35] : memref<8x128xf32, #tpu.memory_space<vmem>>, vector<8x128xf32>
    tpu.vector_store %arg14[%c0_34, %c0_35], %37 {strides = array<i32>} : memref<8x128xf32, #tpu.memory_space<vmem>>, vector<8x128xf32>,
    return
  }
  func.func @transform_0(%arg0: i32) -> (i32, i32) {
    %c0_i32 = arith.constant 0 : i32
    %c0_i32_0 = arith.constant 0 : i32
    return %arg0, %c0_i32 : i32, i32
  }
  func.func @transform_1(%arg0: i32) -> (i32, i32) {
    %c0_i32 = arith.constant 0 : i32
    %c0_i32_0 = arith.constant 0 : i32
    return %arg0, %c0_i32 : i32, i32
  }
  func.func @transform_2(%arg0: i32) -> (i32, i32) {
    %c0_i32 = arith.constant 0 : i32
    %c0_i32_0 = arith.constant 0 : i32
    %c0_i32_1 = arith.constant 0 : i32
    return %c0_i32, %c0_i32_0 : i32, i32
  }
  func.func @transform_3(%arg0: i32) -> (i32, i32) {
    %c0_i32 = arith.constant 0 : i32
    %c0_i32_0 = arith.constant 0 : i32
    %c0_i32_1 = arith.constant 0 : i32
    return %c0_i32, %c0_i32_0 : i32, i32
  }
  func.func @transform_4(%arg0: i32) -> (i32, i32) {
    %c0_i32 = arith.constant 0 : i32
    %c0_i32_0 = arith.constant 0 : i32
    %c0_i32_1 = arith.constant 0 : i32
    return %c0_i32, %c0_i32_0 : i32, i32
  }
  func.func @transform_5(%arg0: i32) -> (i32, i32) {
    %c0_i32 = arith.constant 0 : i32
    %c0_i32_0 = arith.constant 0 : i32
    %c0_i32_1 = arith.constant 0 : i32
    return %c0_i32, %c0_i32_0 : i32, i32
  }
  func.func @transform_6(%arg0: i32) -> (i32, i32) {
    %c0_i32 = arith.constant 0 : i32
    %c0_i32_0 = arith.constant 0 : i32
    %c0_i32_1 = arith.constant 0 : i32
    return %c0_i32, %c0_i32_0 : i32, i32
  }
  func.func @transform_7(%arg0: i32) -> (i32, i32) {
    %c0_i32 = arith.constant 0 : i32
    %c0_i32_0 = arith.constant 0 : i32
    %c0_i32_1 = arith.constant 0 : i32
    return %c0_i32, %c0_i32_0 : i32, i32
  }
  func.func @transform_8(%arg0: i32) -> (i32, i32) {
    %c0_i32 = arith.constant 0 : i32
    %c0_i32_0 = arith.constant 0 : i32
    %c0_i32_1 = arith.constant 0 : i32
    return %c0_i32, %c0_i32_0 : i32, i32
  }
  func.func @transform_9(%arg0: i32) -> (i32, i32) {
    %c0_i32 = arith.constant 0 : i32
    %c0_i32_0 = arith.constant 0 : i32
    %c0_i32_1 = arith.constant 0 : i32
    return %c0_i32, %c0_i32_0 : i32, i32
  }
  func.func @transform_10(%arg0: i32) -> (i32, i32) {
    %c0_i32 = arith.constant 0 : i32
    %c0_i32_0 = arith.constant 0 : i32
    %c0_i32_1 = arith.constant 0 : i32
    return %c0_i32, %c0_i32_0 : i32, i32
  }
  func.func @transform_11(%arg0: i32) -> (i32, i32) {
    %c0_i32 = arith.constant 0 : i32
    %c0_i32_0 = arith.constant 0 : i32
    %c0_i32_1 = arith.constant 0 : i32
    return %c0_i32, %c0_i32_0 : i32, i32
  }
  func.func @transform_12(%arg0: i32) -> (i32, i32) {
    %c0_i32 = arith.constant 0 : i32
    %c0_i32_0 = arith.constant 0 : i32
    %c0_i32_1 = arith.constant 0 : i32
    return %c0_i32, %c0_i32_0 : i32, i32
  }
  func.func @transform_13(%arg0: i32) -> (i32, i32) {
    %c0_i32 = arith.constant 0 : i32
    %c0_i32_0 = arith.constant 0 : i32
    return %arg0, %c0_i32 : i32, i32
  }
}

</mosaic_0001>

<llo_original>
// kernel: critic_image_forward.1
$region0: #{critic_image_forward.1}
  #allocation0 [shape = 'u32[]', space=smem, size = 0x4, offset = 0x4, fixed_abs, tag = 'smem constant byte address 0x4 - core index']
  #allocation1 [shape = 'u32[144,128]{1,0:T(1,128)}', space=vmem, size = 0x12000, scoped, tag = 'internal scratch']
  %s0 = inlined_call_operand.vmem [shape: f32[8,1024], index: 0, kind: input, shape index: {}]
  %s1 = inlined_call_operand.vmem [shape: f32[8,4], index: 1, kind: input, shape index: {}]
  %s2 = inlined_call_operand.hbm [shape: f32[1024,512], index: 2, kind: input, shape index: {}]
  %s3 = inlined_call_operand.hbm [shape: f32[1,512], index: 3, kind: input, shape index: {}]
  %s4 = inlined_call_operand.hbm [shape: f32[512,256], index: 4, kind: input, shape index: {}]
  %s5 = inlined_call_operand.hbm [shape: f32[1,256], index: 5, kind: input, shape index: {}]
  %s6 = inlined_call_operand.hbm [shape: f32[256,512], index: 6, kind: input, shape index: {}]
  %s7 = inlined_call_operand.hbm [shape: f32[4,512], index: 7, kind: input, shape index: {}]
  %s8 = inlined_call_operand.hbm [shape: f32[1,512], index: 8, kind: input, shape index: {}]
  %s9 = inlined_call_operand.hbm [shape: f32[512,128], index: 9, kind: input, shape index: {}]
  %s10 = inlined_call_operand.hbm [shape: f32[1,128], index: 10, kind: input, shape index: {}]
  %s11 = inlined_call_operand.hbm [shape: f32[128,128], index: 11, kind: input, shape index: {}]
  %s12 = inlined_call_operand.hbm [shape: f32[1,128], index: 12, kind: input, shape index: {}]
  %s13 = inlined_call_operand.vmem [shape: f32[8,128], index: 13, kind: output, shape index: {}]
  %s14 = sld [smem:[#allocation0]]
  $region106: #{critic_image_forward.1} parent=0
    _
  %s16 = ssub.s32 1, %s14
  %s17 = scalar_select 0, %s16, %s14
  $region1: #{critic_image_forward.1} parent=0
    #allocation2 [shape = 'u8[2097152]{0}', space=vmem, size = 0x200000, scoped, tag = 'input window, operand 2, single buffered']
    #allocation3 [shape = 's32[1]{0}', space=sflag, size = 0x4, scoped, tag = 'scoped memory for critic_image_forward.1']
    #allocation4 [shape = 'u8[2048]{0}', space=vmem, size = 0x800, scoped, tag = 'input window, operand 3, single buffered']
    #allocation5 [shape = 's32[1]{0}', space=sflag, size = 0x4, scoped, tag = 'scoped memory for critic_image_forward.1']
    #allocation6 [shape = 'u8[524288]{0}', space=vmem, size = 0x80000, scoped, tag = 'input window, operand 4, single buffered']
    #allocation7 [shape = 'u8[1024]{0}', space=vmem, size = 0x400, scoped, tag = 'input window, operand 5, single buffered']
    #allocation8 [shape = 's32[1]{0}', space=sflag, size = 0x4, scoped, tag = 'scoped memory for critic_image_forward.1']
    #allocation9 [shape = 'u8[524288]{0}', space=vmem, size = 0x80000, scoped, tag = 'input window, operand 6, single buffered']
    #allocation10 [shape = 'u8[8192]{0}', space=vmem, size = 0x2000, scoped, tag = 'input window, operand 7, single buffered']
    #allocation11 [shape = 's32[1]{0}', space=sflag, size = 0x4, scoped, tag = 'scoped memory for critic_image_forward.1']
    #allocation12 [shape = 'u8[2048]{0}', space=vmem, size = 0x800, scoped, tag = 'input window, operand 8, single buffered']
    #allocation13 [shape = 'u8[262144]{0}', space=vmem, size = 0x40000, scoped, tag = 'input window, operand 9, single buffered']
    #allocation14 [shape = 's32[1]{0}', space=sflag, size = 0x4, scoped, tag = 'scoped memory for critic_image_forward.1']
    #allocation15 [shape = 'u8[512]{0}', space=vmem, size = 0x400, scoped, tag = 'input window, operand 10, single buffered']
    #allocation16 [shape = 'u8[65536]{0}', space=vmem, size = 0x10000, scoped, tag = 'input window, operand 11, single buffered']
    #allocation17 [shape = 's32[1]{0}', space=sflag, size = 0x4, scoped, tag = 'scoped memory for critic_image_forward.1']
    #allocation18 [shape = 'u8[512]{0}', space=vmem, size = 0x400, scoped, tag = 'input window, operand 12, single buffered']
    %18 = vsyncpa [#allocation3], 0
    %19 = vsyncpa [#allocation5], 0
    %20 = vsyncpa [#allocation8], 0
    %21 = vsyncpa [#allocation11], 0
    %22 = vsyncpa [#allocation14], 0
    %23 = vsyncpa [#allocation17], 0
    // Predicated region
    $region2: #{critic_image_forward.1} parent=1 // pred_check
      _
    $region3: #{critic_image_forward.1} parent=1 // pred_check_branch
      %25 = sbr.rel (0) target = $region5
    $region4: #{critic_image_forward.1} parent=1 // pred_region
      _
    $region5: #{critic_image_forward.1} parent=1 // pred_fallthru
      _
    // Predicated region
    $region6: #{critic_image_forward.1} parent=1 // pred_check
      _
    $region7: #{critic_image_forward.1} parent=1 // pred_check_branch
      %27 = sbr.rel (0) target = $region9
    $region8: #{critic_image_forward.1} parent=1 // pred_region
      _
    $region9: #{critic_image_forward.1} parent=1 // pred_fallthru
      _
    // Predicated region
    $region10: #{critic_image_forward.1} parent=1 // pred_check
      _
    $region11: #{critic_image_forward.1} parent=1 // pred_check_branch
      %29 = sbr.rel (0) target = $region13
    $region12: #{critic_image_forward.1} parent=1 // pred_region
      %s31 = ssub.s32 65536, 65536
      %32 = vsyncadd [#allocation3], %s31
      %s33 = sshll.u32 [#allocation2], 4
      %s34 = int_to_ptr.vmem [resolvable:$true] %s33
      %39 = dma.hbm_to_vmem [thread:$0]  %s2, 65536, %s34, [#allocation3], 512, 512, 32
    $region13: #{critic_image_forward.1} parent=1 // pred_fallthru
      _
    // Predicated region
    $region14: #{critic_image_forward.1} parent=1 // pred_check
      _
    $region15: #{critic_image_forward.1} parent=1 // pred_check_branch
      %41 = sbr.rel (0) target = $region17
    $region16: #{critic_image_forward.1} parent=1 // pred_region
      %s43 = ssub.s32 64, 64
      %44 = vsyncadd [#allocation5], %s43
      %s46 = sshll.u32 [#allocation4], 4
      %s47 = int_to_ptr.vmem [resolvable:$true] %s46
      %49 = dma.hbm_to_vmem [thread:$0]  %s3, 64, %s47, [#allocation5]
    $region17: #{critic_image_forward.1} parent=1 // pred_fallthru
      _
    // Predicated region
    $region18: #{critic_image_forward.1} parent=1 // pred_check
      _
    $region19: #{critic_image_forward.1} parent=1 // pred_check_branch
      %51 = sbr.rel (0) target = $region21
    $region20: #{critic_image_forward.1} parent=1 // pred_region
      %s53 = ssub.s32 16384, 16384
      %54 = vsyncadd [#allocation5], %s53
      %s55 = sshll.u32 [#allocation6], 4
      %s56 = int_to_ptr.vmem [resolvable:$true] %s55
      %61 = dma.hbm_to_vmem [thread:$0]  %s4, 16384, %s56, [#allocation5], 256, 256, 16
    $region21: #{critic_image_forward.1} parent=1 // pred_fallthru
      _
    // Predicated region
    $region22: #{critic_image_forward.1} parent=1 // pred_check
      _
    $region23: #{critic_image_forward.1} parent=1 // pred_check_branch
      %63 = sbr.rel (0) target = $region25
    $region24: #{critic_image_forward.1} parent=1 // pred_region
      %s65 = ssub.s32 32, 32
      %66 = vsyncadd [#allocation8], %s65
      %s68 = sshll.u32 [#allocation7], 4
      %s69 = int_to_ptr.vmem [resolvable:$true] %s68
      %71 = dma.hbm_to_vmem [thread:$0]  %s5, 32, %s69, [#allocation8]
    $region25: #{critic_image_forward.1} parent=1 // pred_fallthru
      _
    // Predicated region
    $region26: #{critic_image_forward.1} parent=1 // pred_check
      _
    $region27: #{critic_image_forward.1} parent=1 // pred_check_branch
      %73 = sbr.rel (0) target = $region29
    $region28: #{critic_image_forward.1} parent=1 // pred_region
      %s75 = ssub.s32 16384, 16384
      %76 = vsyncadd [#allocation8], %s75
      %s77 = sshll.u32 [#allocation9], 4
      %s78 = int_to_ptr.vmem [resolvable:$true] %s77
      %83 = dma.hbm_to_vmem [thread:$0]  %s6, 16384, %s78, [#allocation8], 512, 512, 32
    $region29: #{critic_image_forward.1} parent=1 // pred_fallthru
      _
    // Predicated region
    $region30: #{critic_image_forward.1} parent=1 // pred_check
      _
    $region31: #{critic_image_forward.1} parent=1 // pred_check_branch
      %85 = sbr.rel (0) target = $region33
    $region32: #{critic_image_forward.1} parent=1 // pred_region
      %s87 = ssub.s32 256, 256
      %88 = vsyncadd [#allocation11], %s87
      %s90 = sshll.u32 [#allocation10], 4
      %s91 = int_to_ptr.vmem [resolvable:$true] %s90
      %93 = dma.hbm_to_vmem [thread:$0]  %s7, 256, %s91, [#allocation11]
    $region33: #{critic_image_forward.1} parent=1 // pred_fallthru
      _
    // Predicated region
    $region34: #{critic_image_forward.1} parent=1 // pred_check
      _
    $region35: #{critic_image_forward.1} parent=1 // pred_check_branch
      %95 = sbr.rel (0) target = $region37
    $region36: #{critic_image_forward.1} parent=1 // pred_region
      %s97 = ssub.s32 64, 64
      %98 = vsyncadd [#allocation11], %s97
      %s100 = sshll.u32 [#allocation12], 4
      %s101 = int_to_ptr.vmem [resolvable:$true] %s100
      %103 = dma.hbm_to_vmem [thread:$0]  %s8, 64, %s101, [#allocation11]
    $region37: #{critic_image_forward.1} parent=1 // pred_fallthru
      _
    // Predicated region
    $region38: #{critic_image_forward.1} parent=1 // pred_check
      _
    $region39: #{critic_image_forward.1} parent=1 // pred_check_branch
      %105 = sbr.rel (0) target = $region41
    $region40: #{critic_image_forward.1} parent=1 // pred_region
      %s107 = ssub.s32 8192, 8192
      %108 = vsyncadd [#allocation14], %s107
      %s109 = sshll.u32 [#allocation13], 4
      %s110 = int_to_ptr.vmem [resolvable:$true] %s109
      %115 = dma.hbm_to_vmem [thread:$0]  %s9, 8192, %s110, [#allocation14], 128, 128, 8
    $region41: #{critic_image_forward.1} parent=1 // pred_fallthru
      _
    // Predicated region
    $region42: #{critic_image_forward.1} parent=1 // pred_check
      _
    $region43: #{critic_image_forward.1} parent=1 // pred_check_branch
      %117 = sbr.rel (0) target = $region45
    $region44: #{critic_image_forward.1} parent=1 // pred_region
      %s119 = ssub.s32 16, 16
      %120 = vsyncadd [#allocation14], %s119
      %s122 = sshll.u32 [#allocation15], 4
      %s123 = int_to_ptr.vmem [resolvable:$true] %s122
      %125 = dma.hbm_to_vmem [thread:$0]  %s10, 16, %s123, [#allocation14]
    $region45: #{critic_image_forward.1} parent=1 // pred_fallthru
      _
    // Predicated region
    $region46: #{critic_image_forward.1} parent=1 // pred_check
      _
    $region47: #{critic_image_forward.1} parent=1 // pred_check_branch
      %127 = sbr.rel (0) target = $region49
    $region48: #{critic_image_forward.1} parent=1 // pred_region
      %s129 = ssub.s32 2048, 2048
      %130 = vsyncadd [#allocation17], %s129
      %s131 = sshll.u32 [#allocation16], 4
      %s132 = int_to_ptr.vmem [resolvable:$true] %s131
      %137 = dma.hbm_to_vmem [thread:$0]  %s11, 2048, %s132, [#allocation17], 128, 128, 8
    $region49: #{critic_image_forward.1} parent=1 // pred_fallthru
      _
    // Predicated region
    $region50: #{critic_image_forward.1} parent=1 // pred_check
      _
    $region51: #{critic_image_forward.1} parent=1 // pred_check_branch
      %139 = sbr.rel (0) target = $region53
    $region52: #{critic_image_forward.1} parent=1 // pred_region
      %s141 = ssub.s32 16, 16
      %142 = vsyncadd [#allocation17], %s141
      %s144 = sshll.u32 [#allocation18], 4
      %s145 = int_to_ptr.vmem [resolvable:$true] %s144
      %147 = dma.hbm_to_vmem [thread:$0]  %s12, 16, %s145, [#allocation17]
    $region53: #{critic_image_forward.1} parent=1 // pred_fallthru
      _
    // Predicated region
    $region54: #{critic_image_forward.1} parent=1 // pred_check
      _
    $region55: #{critic_image_forward.1} parent=1 // pred_check_branch
      %149 = sbr.rel (0) target = $region57
    $region56: #{critic_image_forward.1} parent=1 // pred_region
      %150 = dma.done [#allocation3], 65536
    $region57: #{critic_image_forward.1} parent=1 // pred_fallthru
      _
    // Predicated region
    $region58: #{critic_image_forward.1} parent=1 // pred_check
      _
    $region59: #{critic_image_forward.1} parent=1 // pred_check_branch
      %152 = sbr.rel (0) target = $region61
    $region60: #{critic_image_forward.1} parent=1 // pred_region
      %153 = dma.done [#allocation5], 64
    $region61: #{critic_image_forward.1} parent=1 // pred_fallthru
      _
    // Predicated region
    $region62: #{critic_image_forward.1} parent=1 // pred_check
      _
    $region63: #{critic_image_forward.1} parent=1 // pred_check_branch
      %155 = sbr.rel (0) target = $region65
    $region64: #{critic_image_forward.1} parent=1 // pred_region
      %156 = dma.done [#allocation5], 16384
    $region65: #{critic_image_forward.1} parent=1 // pred_fallthru
      _
    // Predicated region
    $region66: #{critic_image_forward.1} parent=1 // pred_check
      _
    $region67: #{critic_image_forward.1} parent=1 // pred_check_branch
      %158 = sbr.rel (0) target = $region69
    $region68: #{critic_image_forward.1} parent=1 // pred_region
      %159 = dma.done [#allocation8], 32
    $region69: #{critic_image_forward.1} parent=1 // pred_fallthru
      _
    // Predicated region
    $region70: #{critic_image_forward.1} parent=1 // pred_check
      _
    $region71: #{critic_image_forward.1} parent=1 // pred_check_branch
      %161 = sbr.rel (0) target = $region73
    $region72: #{critic_image_forward.1} parent=1 // pred_region
      %162 = dma.done [#allocation8], 16384
    $region73: #{critic_image_forward.1} parent=1 // pred_fallthru
      _
    // Predicated region
    $region74: #{critic_image_forward.1} parent=1 // pred_check
      _
    $region75: #{critic_image_forward.1} parent=1 // pred_check_branch
      %164 = sbr.rel (0) target = $region77
    $region76: #{critic_image_forward.1} parent=1 // pred_region
      %165 = dma.done [#allocation11], 256
    $region77: #{critic_image_forward.1} parent=1 // pred_fallthru
      _
    // Predicated region
    $region78: #{critic_image_forward.1} parent=1 // pred_check
      _
    $region79: #{critic_image_forward.1} parent=1 // pred_check_branch
      %167 = sbr.rel (0) target = $region81
    $region80: #{critic_image_forward.1} parent=1 // pred_region
      %168 = dma.done [#allocation11], 64
    $region81: #{critic_image_forward.1} parent=1 // pred_fallthru
      _
    // Predicated region
    $region82: #{critic_image_forward.1} parent=1 // pred_check
      _
    $region83: #{critic_image_forward.1} parent=1 // pred_check_branch
      %170 = sbr.rel (0) target = $region85
    $region84: #{critic_image_forward.1} parent=1 // pred_region
      %171 = dma.done [#allocation14], 8192
    $region85: #{critic_image_forward.1} parent=1 // pred_fallthru
      _
    // Predicated region
    $region86: #{critic_image_forward.1} parent=1 // pred_check
      _
    $region87: #{critic_image_forward.1} parent=1 // pred_check_branch
      %173 = sbr.rel (0) target = $region89
    $region88: #{critic_image_forward.1} parent=1 // pred_region
      %174 = dma.done [#allocation14], 16
    $region89: #{critic_image_forward.1} parent=1 // pred_fallthru
      _
    // Predicated region
    $region90: #{critic_image_forward.1} parent=1 // pred_check
      _
    $region91: #{critic_image_forward.1} parent=1 // pred_check_branch
      %176 = sbr.rel (0) target = $region93
    $region92: #{critic_image_forward.1} parent=1 // pred_region
      %177 = dma.done [#allocation17], 2048
    $region93: #{critic_image_forward.1} parent=1 // pred_fallthru
      _
    // Predicated region
    $region94: #{critic_image_forward.1} parent=1 // pred_check
      _
    $region95: #{critic_image_forward.1} parent=1 // pred_check_branch
      %179 = sbr.rel (0) target = $region97
    $region96: #{critic_image_forward.1} parent=1 // pred_region
      %180 = dma.done [#allocation17], 16
    $region97: #{critic_image_forward.1} parent=1 // pred_fallthru
      _
    %v181 = vld [vmem:[%s0] sm:$0xff]
    %v182 = vld [vmem:[%s0 + $0x8] sm:$0xff]
    %v183 = vld [vmem:[%s0 + $0x10] sm:$0xff]
    %v184 = vld [vmem:[%s0 + $0x18] sm:$0xff]
    %v185 = vld [vmem:[%s0 + $0x20] sm:$0xff]
    %v186 = vld [vmem:[%s0 + $0x28] sm:$0xff]
    %v187 = vld [vmem:[%s0 + $0x30] sm:$0xff]
    %v188 = vld [vmem:[%s0 + $0x38] sm:$0xff]
    %v189 = vld [vmem:[#allocation2] sm:$0xff]
    %v190 = vld [vmem:[#allocation2 + $0x8] sm:$0xff]
    %v191 = vld [vmem:[#allocation2 + $0x10] sm:$0xff]
    %v192 = vld [vmem:[#allocation2 + $0x18] sm:$0xff]
    %v193 = vld [vmem:[#allocation2 + $0x20] sm:$0xff]
    %v194 = vld [vmem:[#allocation2 + $0x28] sm:$0xff]
    %v195 = vld [vmem:[#allocation2 + $0x30] sm:$0xff]
    %v196 = vld [vmem:[#allocation2 + $0x38] sm:$0xff]
    %v197 = vld [vmem:[#allocation2 + $0x40] sm:$0xff]
    %v198 = vld [vmem:[#allocation2 + $0x48] sm:$0xff]
    %v199 = vld [vmem:[#allocation2 + $0x50] sm:$0xff]
    %v200 = vld [vmem:[#allocation2 + $0x58] sm:$0xff]
    %v201 = vld [vmem:[#allocation2 + $0x60] sm:$0xff]
    %v202 = vld [vmem:[#allocation2 + $0x68] sm:$0xff]
    %v203 = vld [vmem:[#allocation2 + $0x70] sm:$0xff]
    %v204 = vld [vmem:[#allocation2 + $0x78] sm:$0xff]
    %v205 = vld [vmem:[#allocation2 + $0x80] sm:$0xff]
    %v206 = vld [vmem:[#allocation2 + $0x88] sm:$0xff]
    %v207 = vld [vmem:[#allocation2 + $0x90] sm:$0xff]
    %v208 = vld [vmem:[#allocation2 + $0x98] sm:$0xff]
    %v209 = vld [vmem:[#allocation2 + $0xa0] sm:$0xff]
    %v210 = vld [vmem:[#allocation2 + $0xa8] sm:$0xff]
    %v211 = vld [vmem:[#allocation2 + $0xb0] sm:$0xff]
    %v212 = vld [vmem:[#allocation2 + $0xb8] sm:$0xff]
    %v213 = vld [vmem:[#allocation2 + $0xc0] sm:$0xff]
    %v214 = vld [vmem:[#allocation2 + $0xc8] sm:$0xff]
    %v215 = vld [vmem:[#allocation2 + $0xd0] sm:$0xff]
    %v216 = vld [vmem:[#allocation2 + $0xd8] sm:$0xff]
    %v217 = vld [vmem:[#allocation2 + $0xe0] sm:$0xff]
    %v218 = vld [vmem:[#allocation2 + $0xe8] sm:$0xff]
    %v219 = vld [vmem:[#allocation2 + $0xf0] sm:$0xff]
    %v220 = vld [vmem:[#allocation2 + $0xf8] sm:$0xff]
    %v221 = vld [vmem:[#allocation2 + $0x100] sm:$0xff]
    %v222 = vld [vmem:[#allocation2 + $0x108] sm:$0xff]
    %v223 = vld [vmem:[#allocation2 + $0x110] sm:$0xff]
    %v224 = vld [vmem:[#allocation2 + $0x118] sm:$0xff]
    %v225 = vld [vmem:[#allocation2 + $0x120] sm:$0xff]
    %v226 = vld [vmem:[#allocation2 + $0x128] sm:$0xff]
    %v227 = vld [vmem:[#allocation2 + $0x130] sm:$0xff]
    %v228 = vld [vmem:[#allocation2 + $0x138] sm:$0xff]
    %v229 = vld [vmem:[#allocation2 + $0x140] sm:$0xff]
    %v230 = vld [vmem:[#allocation2 + $0x148] sm:$0xff]
    %v231 = vld [vmem:[#allocation2 + $0x150] sm:$0xff]
    %v232 = vld [vmem:[#allocation2 + $0x158] sm:$0xff]
    %v233 = vld [vmem:[#allocation2 + $0x160] sm:$0xff]
    %v234 = vld [vmem:[#allocation2 + $0x168] sm:$0xff]
    %v235 = vld [vmem:[#allocation2 + $0x170] sm:$0xff]
    %v236 = vld [vmem:[#allocation2 + $0x178] sm:$0xff]
    %v237 = vld [vmem:[#allocation2 + $0x180] sm:$0xff]
    %v238 = vld [vmem:[#allocation2 + $0x188] sm:$0xff]
    %v239 = vld [vmem:[#allocation2 + $0x190] sm:$0xff]
    %v240 = vld [vmem:[#allocation2 + $0x198] sm:$0xff]
    %v241 = vld [vmem:[#allocation2 + $0x1a0] sm:$0xff]
    %v242 = vld [vmem:[#allocation2 + $0x1a8] sm:$0xff]
    %v243 = vld [vmem:[#allocation2 + $0x1b0] sm:$0xff]
    %v244 = vld [vmem:[#allocation2 + $0x1b8] sm:$0xff]
    %v245 = vld [vmem:[#allocation2 + $0x1c0] sm:$0xff]
    %v246 = vld [vmem:[#allocation2 + $0x1c8] sm:$0xff]
    %v247 = vld [vmem:[#allocation2 + $0x1d0] sm:$0xff]
    %v248 = vld [vmem:[#allocation2 + $0x1d8] sm:$0xff]
    %v249 = vld [vmem:[#allocation2 + $0x1e0] sm:$0xff]
    %v250 = vld [vmem:[#allocation2 + $0x1e8] sm:$0xff]
    %v251 = vld [vmem:[#allocation2 + $0x1f0] sm:$0xff]
    %v252 = vld [vmem:[#allocation2 + $0x1f8] sm:$0xff]
    %v253 = vld [vmem:[#allocation2 + $0x200] sm:$0xff]
    %v254 = vld [vmem:[#allocation2 + $0x208] sm:$0xff]
    %v255 = vld [vmem:[#allocation2 + $0x210] sm:$0xff]
    %v256 = vld [vmem:[#allocation2 + $0x218] sm:$0xff]
    %v257 = vld [vmem:[#allocation2 + $0x220] sm:$0xff]
    %v258 = vld [vmem:[#allocation2 + $0x228] sm:$0xff]
    %v259 = vld [vmem:[#allocation2 + $0x230] sm:$0xff]
    %v260 = vld [vmem:[#allocation2 + $0x238] sm:$0xff]
    %v261 = vld [vmem:[#allocation2 + $0x240] sm:$0xff]
    %v262 = vld [vmem:[#allocation2 + $0x248] sm:$0xff]
    %v263 = vld [vmem:[#allocation2 + $0x250] sm:$0xff]
    %v264 = vld [vmem:[#allocation2 + $0x258] sm:$0xff]
    %v265 = vld [vmem:[#allocation2 + $0x260] sm:$0xff]
    %v266 = vld [vmem:[#allocation2 + $0x268] sm:$0xff]
    %v267 = vld [vmem:[#allocation2 + $0x270] sm:$0xff]
    %v268 = vld [vmem:[#allocation2 + $0x278] sm:$0xff]
    %v269 = vld [vmem:[#allocation2 + $0x280] sm:$0xff]
    %v270 = vld [vmem:[#allocation2 + $0x288] sm:$0xff]
    %v271 = vld [vmem:[#allocation2 + $0x290] sm:$0xff]
    %v272 = vld [vmem:[#allocation2 + $0x298] sm:$0xff]
    %v273 = vld [vmem:[#allocation2 + $0x2a0] sm:$0xff]
    %v274 = vld [vmem:[#allocation2 + $0x2a8] sm:$0xff]
    %v275 = vld [vmem:[#allocation2 + $0x2b0] sm:$0xff]
    %v276 = vld [vmem:[#allocation2 + $0x2b8] sm:$0xff]
    %v277 = vld [vmem:[#allocation2 + $0x2c0] sm:$0xff]
    %v278 = vld [vmem:[#allocation2 + $0x2c8] sm:$0xff]
    %v279 = vld [vmem:[#allocation2 + $0x2d0] sm:$0xff]
    %v280 = vld [vmem:[#allocation2 + $0x2d8] sm:$0xff]
    %v281 = vld [vmem:[#allocation2 + $0x2e0] sm:$0xff]
    %v282 = vld [vmem:[#allocation2 + $0x2e8] sm:$0xff]
    %v283 = vld [vmem:[#allocation2 + $0x2f0] sm:$0xff]
    %v284 = vld [vmem:[#allocation2 + $0x2f8] sm:$0xff]
    %v285 = vld [vmem:[#allocation2 + $0x300] sm:$0xff]
    %v286 = vld [vmem:[#allocation2 + $0x308] sm:$0xff]
    %v287 = vld [vmem:[#allocation2 + $0x310] sm:$0xff]
    %v288 = vld [vmem:[#allocation2 + $0x318] sm:$0xff]
    %v289 = vld [vmem:[#allocation2 + $0x320] sm:$0xff]
    %v290 = vld [vmem:[#allocation2 + $0x328] sm:$0xff]
    %v291 = vld [vmem:[#allocation2 + $0x330] sm:$0xff]
    %v292 = vld [vmem:[#allocation2 + $0x338] sm:$0xff]
    %v293 = vld [vmem:[#allocation2 + $0x340] sm:$0xff]
    %v294 = vld [vmem:[#allocation2 + $0x348] sm:$0xff]
    %v295 = vld [vmem:[#allocation2 + $0x350] sm:$0xff]
    %v296 = vld [vmem:[#allocation2 + $0x358] sm:$0xff]
    %v297 = vld [vmem:[#allocation2 + $0x360] sm:$0xff]
    %v298 = vld [vmem:[#allocation2 + $0x368] sm:$0xff]
    %v299 = vld [vmem:[#allocation2 + $0x370] sm:$0xff]
    %v300 = vld [vmem:[#allocation2 + $0x378] sm:$0xff]
    %v301 = vld [vmem:[#allocation2 + $0x380] sm:$0xff]
    %v302 = vld [vmem:[#allocation2 + $0x388] sm:$0xff]
    %v303 = vld [vmem:[#allocation2 + $0x390] sm:$0xff]
    %v304 = vld [vmem:[#allocation2 + $0x398] sm:$0xff]
    %v305 = vld [vmem:[#allocation2 + $0x3a0] sm:$0xff]
    %v306 = vld [vmem:[#allocation2 + $0x3a8] sm:$0xff]
    %v307 = vld [vmem:[#allocation2 + $0x3b0] sm:$0xff]
    %v308 = vld [vmem:[#allocation2 + $0x3b8] sm:$0xff]
    %v309 = vld [vmem:[#allocation2 + $0x3c0] sm:$0xff]
    %v310 = vld [vmem:[#allocation2 + $0x3c8] sm:$0xff]
    %v311 = vld [vmem:[#allocation2 + $0x3d0] sm:$0xff]
    %v312 = vld [vmem:[#allocation2 + $0x3d8] sm:$0xff]
    %v313 = vld [vmem:[#allocation2 + $0x3e0] sm:$0xff]
    %v314 = vld [vmem:[#allocation2 + $0x3e8] sm:$0xff]
    %v315 = vld [vmem:[#allocation2 + $0x3f0] sm:$0xff]
    %v316 = vld [vmem:[#allocation2 + $0x3f8] sm:$0xff]
    %v317 = vld [vmem:[#allocation2 + $0x400] sm:$0xff]
    %v318 = vld [vmem:[#allocation2 + $0x408] sm:$0xff]
    %v319 = vld [vmem:[#allocation2 + $0x410] sm:$0xff]
    %v320 = vld [vmem:[#allocation2 + $0x418] sm:$0xff]
    %v321 = vld [vmem:[#allocation2 + $0x420] sm:$0xff]
    %v322 = vld [vmem:[#allocation2 + $0x428] sm:$0xff]
    %v323 = vld [vmem:[#allocation2 + $0x430] sm:$0xff]
    %v324 = vld [vmem:[#allocation2 + $0x438] sm:$0xff]
    %v325 = vld [vmem:[#allocation2 + $0x440] sm:$0xff]
    %v326 = vld [vmem:[#allocation2 + $0x448] sm:$0xff]
    %v327 = vld [vmem:[#allocation2 + $0x450] sm:$0xff]
    %v328 = vld [vmem:[#allocation2 + $0x458] sm:$0xff]
    %v329 = vld [vmem:[#allocation2 + $0x460] sm:$0xff]
    %v330 = vld [vmem:[#allocation2 + $0x468] sm:$0xff]
    %v331 = vld [vmem:[#allocation2 + $0x470] sm:$0xff]
    %v332 = vld [vmem:[#allocation2 + $0x478] sm:$0xff]
    %v333 = vld [vmem:[#allocation2 + $0x480] sm:$0xff]
    %v334 = vld [vmem:[#allocation2 + $0x488] sm:$0xff]
    %v335 = vld [vmem:[#allocation2 + $0x490] sm:$0xff]
    %v336 = vld [vmem:[#allocation2 + $0x498] sm:$0xff]
    %v337 = vld [vmem:[#allocation2 + $0x4a0] sm:$0xff]
    %v338 = vld [vmem:[#allocation2 + $0x4a8] sm:$0xff]
    %v339 = vld [vmem:[#allocation2 + $0x4b0] sm:$0xff]
    %v340 = vld [vmem:[#allocation2 + $0x4b8] sm:$0xff]
    %v341 = vld [vmem:[#allocation2 + $0x4c0] sm:$0xff]
    %v342 = vld [vmem:[#allocation2 + $0x4c8] sm:$0xff]
    %v343 = vld [vmem:[#allocation2 + $0x4d0] sm:$0xff]
    %v344 = vld [vmem:[#allocation2 + $0x4d8] sm:$0xff]
    %v345 = vld [vmem:[#allocation2 + $0x4e0] sm:$0xff]
    %v346 = vld [vmem:[#allocation2 + $0x4e8] sm:$0xff]
    %v347 = vld [vmem:[#allocation2 + $0x4f0] sm:$0xff]
    %v348 = vld [vmem:[#allocation2 + $0x4f8] sm:$0xff]
    %v349 = vld [vmem:[#allocation2 + $0x500] sm:$0xff]
    %v350 = vld [vmem:[#allocation2 + $0x508] sm:$0xff]
    %v351 = vld [vmem:[#allocation2 + $0x510] sm:$0xff]
    %v352 = vld [vmem:[#allocation2 + $0x518] sm:$0xff]
    %v353 = vld [vmem:[#allocation2 + $0x520] sm:$0xff]
    %v354 = vld [vmem:[#allocation2 + $0x528] sm:$0xff]
    %v355 = vld [vmem:[#allocation2 + $0x530] sm:$0xff]
    %v356 = vld [vmem:[#allocation2 + $0x538] sm:$0xff]
    %v357 = vld [vmem:[#allocation2 + $0x540] sm:$0xff]
    %v358 = vld [vmem:[#allocation2 + $0x548] sm:$0xff]
    %v359 = vld [vmem:[#allocation2 + $0x550] sm:$0xff]
    %v360 = vld [vmem:[#allocation2 + $0x558] sm:$0xff]
    %v361 = vld [vmem:[#allocation2 + $0x560] sm:$0xff]
    %v362 = vld [vmem:[#allocation2 + $0x568] sm:$0xff]
    %v363 = vld [vmem:[#allocation2 + $0x570] sm:$0xff]
    %v364 = vld [vmem:[#allocation2 + $0x578] sm:$0xff]
    %v365 = vld [vmem:[#allocation2 + $0x580] sm:$0xff]
    %v366 = vld [vmem:[#allocation2 + $0x588] sm:$0xff]
    %v367 = vld [vmem:[#allocation2 + $0x590] sm:$0xff]
    %v368 = vld [vmem:[#allocation2 + $0x598] sm:$0xff]
    %v369 = vld [vmem:[#allocation2 + $0x5a0] sm:$0xff]
    %v370 = vld [vmem:[#allocation2 + $0x5a8] sm:$0xff]
    %v371 = vld [vmem:[#allocation2 + $0x5b0] sm:$0xff]
    %v372 = vld [vmem:[#allocation2 + $0x5b8] sm:$0xff]
    %v373 = vld [vmem:[#allocation2 + $0x5c0] sm:$0xff]
    %v374 = vld [vmem:[#allocation2 + $0x5c8] sm:$0xff]
    %v375 = vld [vmem:[#allocation2 + $0x5d0] sm:$0xff]
    %v376 = vld [vmem:[#allocation2 + $0x5d8] sm:$0xff]
    %v377 = vld [vmem:[#allocation2 + $0x5e0] sm:$0xff]
    %v378 = vld [vmem:[#allocation2 + $0x5e8] sm:$0xff]
    %v379 = vld [vmem:[#allocation2 + $0x5f0] sm:$0xff]
    %v380 = vld [vmem:[#allocation2 + $0x5f8] sm:$0xff]
    %v381 = vld [vmem:[#allocation2 + $0x600] sm:$0xff]
    %v382 = vld [vmem:[#allocation2 + $0x608] sm:$0xff]
    %v383 = vld [vmem:[#allocation2 + $0x610] sm:$0xff]
    %v384 = vld [vmem:[#allocation2 + $0x618] sm:$0xff]
    %v385 = vld [vmem:[#allocation2 + $0x620] sm:$0xff]
    %v386 = vld [vmem:[#allocation2 + $0x628] sm:$0xff]
    %v387 = vld [vmem:[#allocation2 + $0x630] sm:$0xff]
    %v388 = vld [vmem:[#allocation2 + $0x638] sm:$0xff]
    %v389 = vld [vmem:[#allocation2 + $0x640] sm:$0xff]
    %v390 = vld [vmem:[#allocation2 + $0x648] sm:$0xff]
    %v391 = vld [vmem:[#allocation2 + $0x650] sm:$0xff]
    %v392 = vld [vmem:[#allocation2 + $0x658] sm:$0xff]
    %v393 = vld [vmem:[#allocation2 + $0x660] sm:$0xff]
    %v394 = vld [vmem:[#allocation2 + $0x668] sm:$0xff]
    %v395 = vld [vmem:[#allocation2 + $0x670] sm:$0xff]
    %v396 = vld [vmem:[#allocation2 + $0x678] sm:$0xff]
    %v397 = vld [vmem:[#allocation2 + $0x680] sm:$0xff]
    %v398 = vld [vmem:[#allocation2 + $0x688] sm:$0xff]
    %v399 = vld [vmem:[#allocation2 + $0x690] sm:$0xff]
    %v400 = vld [vmem:[#allocation2 + $0x698] sm:$0xff]
    %v401 = vld [vmem:[#allocation2 + $0x6a0] sm:$0xff]
    %v402 = vld [vmem:[#allocation2 + $0x6a8] sm:$0xff]
    %v403 = vld [vmem:[#allocation2 + $0x6b0] sm:$0xff]
    %v404 = vld [vmem:[#allocation2 + $0x6b8] sm:$0xff]
    %v405 = vld [vmem:[#allocation2 + $0x6c0] sm:$0xff]
    %v406 = vld [vmem:[#allocation2 + $0x6c8] sm:$0xff]
    %v407 = vld [vmem:[#allocation2 + $0x6d0] sm:$0xff]
    %v408 = vld [vmem:[#allocation2 + $0x6d8] sm:$0xff]
    %v409 = vld [vmem:[#allocation2 + $0x6e0] sm:$0xff]
    %v410 = vld [vmem:[#allocation2 + $0x6e8] sm:$0xff]
    %v411 = vld [vmem:[#allocation2 + $0x6f0] sm:$0xff]
    %v412 = vld [vmem:[#allocation2 + $0x6f8] sm:$0xff]
    %v413 = vld [vmem:[#allocation2 + $0x700] sm:$0xff]
    %v414 = vld [vmem:[#allocation2 + $0x708] sm:$0xff]
    %v415 = vld [vmem:[#allocation2 + $0x710] sm:$0xff]
    %v416 = vld [vmem:[#allocation2 + $0x718] sm:$0xff]
    %v417 = vld [vmem:[#allocation2 + $0x720] sm:$0xff]
    %v418 = vld [vmem:[#allocation2 + $0x728] sm:$0xff]
    %v419 = vld [vmem:[#allocation2 + $0x730] sm:$0xff]
    %v420 = vld [vmem:[#allocation2 + $0x738] sm:$0xff]
    %v421 = vld [vmem:[#allocation2 + $0x740] sm:$0xff]
    %v422 = vld [vmem:[#allocation2 + $0x748] sm:$0xff]
    %v423 = vld [vmem:[#allocation2 + $0x750] sm:$0xff]
    %v424 = vld [vmem:[#allocation2 + $0x758] sm:$0xff]
    %v425 = vld [vmem:[#allocation2 + $0x760] sm:$0xff]
    %v426 = vld [vmem:[#allocation2 + $0x768] sm:$0xff]
    %v427 = vld [vmem:[#allocation2 + $0x770] sm:$0xff]
    %v428 = vld [vmem:[#allocation2 + $0x778] sm:$0xff]
    %v429 = vld [vmem:[#allocation2 + $0x780] sm:$0xff]
    %v430 = vld [vmem:[#allocation2 + $0x788] sm:$0xff]
    %v431 = vld [vmem:[#allocation2 + $0x790] sm:$0xff]
    %v432 = vld [vmem:[#allocation2 + $0x798] sm:$0xff]
    %v433 = vld [vmem:[#allocation2 + $0x7a0] sm:$0xff]
    %v434 = vld [vmem:[#allocation2 + $0x7a8] sm:$0xff]
    %v435 = vld [vmem:[#allocation2 + $0x7b0] sm:$0xff]
    %v436 = vld [vmem:[#allocation2 + $0x7b8] sm:$0xff]
    %v437 = vld [vmem:[#allocation2 + $0x7c0] sm:$0xff]
    %v438 = vld [vmem:[#allocation2 + $0x7c8] sm:$0xff]
    %v439 = vld [vmem:[#allocation2 + $0x7d0] sm:$0xff]
    %v440 = vld [vmem:[#allocation2 + $0x7d8] sm:$0xff]
    %v441 = vld [vmem:[#allocation2 + $0x7e0] sm:$0xff]
    %v442 = vld [vmem:[#allocation2 + $0x7e8] sm:$0xff]
    %v443 = vld [vmem:[#allocation2 + $0x7f0] sm:$0xff]
    %v444 = vld [vmem:[#allocation2 + $0x7f8] sm:$0xff]
    %v445 = vld [vmem:[#allocation2 + $0x800] sm:$0xff]
    %v446 = vld [vmem:[#allocation2 + $0x808] sm:$0xff]
    %v447 = vld [vmem:[#allocation2 + $0x810] sm:$0xff]
    %v448 = vld [vmem:[#allocation2 + $0x818] sm:$0xff]
    %v449 = vld [vmem:[#allocation2 + $0x820] sm:$0xff]
    %v450 = vld [vmem:[#allocation2 + $0x828] sm:$0xff]
    %v451 = vld [vmem:[#allocation2 + $0x830] sm:$0xff]
    %v452 = vld [vmem:[#allocation2 + $0x838] sm:$0xff]
    %v453 = vld [vmem:[#allocation2 + $0x840] sm:$0xff]
    %v454 = vld [vmem:[#allocation2 + $0x848] sm:$0xff]
    %v455 = vld [vmem:[#allocation2 + $0x850] sm:$0xff]
    %v456 = vld [vmem:[#allocation2 + $0x858] sm:$0xff]
    %v457 = vld [vmem:[#allocation2 + $0x860] sm:$0xff]
    %v458 = vld [vmem:[#allocation2 + $0x868] sm:$0xff]
    %v459 = vld [vmem:[#allocation2 + $0x870] sm:$0xff]
    %v460 = vld [vmem:[#allocation2 + $0x878] sm:$0xff]
    %v461 = vld [vmem:[#allocation2 + $0x880] sm:$0xff]
    %v462 = vld [vmem:[#allocation2 + $0x888] sm:$0xff]
    %v463 = vld [vmem:[#allocation2 + $0x890] sm:$0xff]
    %v464 = vld [vmem:[#allocation2 + $0x898] sm:$0xff]
    %v465 = vld [vmem:[#allocation2 + $0x8a0] sm:$0xff]
    %v466 = vld [vmem:[#allocation2 + $0x8a8] sm:$0xff]
    %v467 = vld [vmem:[#allocation2 + $0x8b0] sm:$0xff]
    %v468 = vld [vmem:[#allocation2 + $0x8b8] sm:$0xff]
    %v469 = vld [vmem:[#allocation2 + $0x8c0] sm:$0xff]
    %v470 = vld [vmem:[#allocation2 + $0x8c8] sm:$0xff]
    %v471 = vld [vmem:[#allocation2 + $0x8d0] sm:$0xff]
    %v472 = vld [vmem:[#allocation2 + $0x8d8] sm:$0xff]
    %v473 = vld [vmem:[#allocation2 + $0x8e0] sm:$0xff]
    %v474 = vld [vmem:[#allocation2 + $0x8e8] sm:$0xff]
    %v475 = vld [vmem:[#allocation2 + $0x8f0] sm:$0xff]
    %v476 = vld [vmem:[#allocation2 + $0x8f8] sm:$0xff]
    %v477 = vld [vmem:[#allocation2 + $0x900] sm:$0xff]
    %v478 = vld [vmem:[#allocation2 + $0x908] sm:$0xff]
    %v479 = vld [vmem:[#allocation2 + $0x910] sm:$0xff]
    %v480 = vld [vmem:[#allocation2 + $0x918] sm:$0xff]
    %v481 = vld [vmem:[#allocation2 + $0x920] sm:$0xff]
    %v482 = vld [vmem:[#allocation2 + $0x928] sm:$0xff]
    %v483 = vld [vmem:[#allocation2 + $0x930] sm:$0xff]
    %v484 = vld [vmem:[#allocation2 + $0x938] sm:$0xff]
    %v485 = vld [vmem:[#allocation2 + $0x940] sm:$0xff]
    %v486 = vld [vmem:[#allocation2 + $0x948] sm:$0xff]
    %v487 = vld [vmem:[#allocation2 + $0x950] sm:$0xff]
    %v488 = vld [vmem:[#allocation2 + $0x958] sm:$0xff]
    %v489 = vld [vmem:[#allocation2 + $0x960] sm:$0xff]
    %v490 = vld [vmem:[#allocation2 + $0x968] sm:$0xff]
    %v491 = vld [vmem:[#allocation2 + $0x970] sm:$0xff]
    %v492 = vld [vmem:[#allocation2 + $0x978] sm:$0xff]
    %v493 = vld [vmem:[#allocation2 + $0x980] sm:$0xff]
    %v494 = vld [vmem:[#allocation2 + $0x988] sm:$0xff]
    %v495 = vld [vmem:[#allocation2 + $0x990] sm:$0xff]
    %v496 = vld [vmem:[#allocation2 + $0x998] sm:$0xff]
    %v497 = vld [vmem:[#allocation2 + $0x9a0] sm:$0xff]
    %v498 = vld [vmem:[#allocation2 + $0x9a8] sm:$0xff]
    %v499 = vld [vmem:[#allocation2 + $0x9b0] sm:$0xff]
    %v500 = vld [vmem:[#allocation2 + $0x9b8] sm:$0xff]
    %v501 = vld [vmem:[#allocation2 + $0x9c0] sm:$0xff]
    %v502 = vld [vmem:[#allocation2 + $0x9c8] sm:$0xff]
    %v503 = vld [vmem:[#allocation2 + $0x9d0] sm:$0xff]
    %v504 = vld [vmem:[#allocation2 + $0x9d8] sm:$0xff]
    %v505 = vld [vmem:[#allocation2 + $0x9e0] sm:$0xff]
    %v506 = vld [vmem:[#allocation2 + $0x9e8] sm:$0xff]
    %v507 = vld [vmem:[#allocation2 + $0x9f0] sm:$0xff]
    %v508 = vld [vmem:[#allocation2 + $0x9f8] sm:$0xff]
    %v509 = vld [vmem:[#allocation2 + $0xa00] sm:$0xff]
    %v510 = vld [vmem:[#allocation2 + $0xa08] sm:$0xff]
    %v511 = vld [vmem:[#allocation2 + $0xa10] sm:$0xff]
    %v512 = vld [vmem:[#allocation2 + $0xa18] sm:$0xff]
    %v513 = vld [vmem:[#allocation2 + $0xa20] sm:$0xff]
    %v514 = vld [vmem:[#allocation2 + $0xa28] sm:$0xff]
    %v515 = vld [vmem:[#allocation2 + $0xa30] sm:$0xff]
    %v516 = vld [vmem:[#allocation2 + $0xa38] sm:$0xff]
    %v517 = vld [vmem:[#allocation2 + $0xa40] sm:$0xff]
    %v518 = vld [vmem:[#allocation2 + $0xa48] sm:$0xff]
    %v519 = vld [vmem:[#allocation2 + $0xa50] sm:$0xff]
    %v520 = vld [vmem:[#allocation2 + $0xa58] sm:$0xff]
    %v521 = vld [vmem:[#allocation2 + $0xa60] sm:$0xff]
    %v522 = vld [vmem:[#allocation2 + $0xa68] sm:$0xff]
    %v523 = vld [vmem:[#allocation2 + $0xa70] sm:$0xff]
    %v524 = vld [vmem:[#allocation2 + $0xa78] sm:$0xff]
    %v525 = vld [vmem:[#allocation2 + $0xa80] sm:$0xff]
    %v526 = vld [vmem:[#allocation2 + $0xa88] sm:$0xff]
    %v527 = vld [vmem:[#allocation2 + $0xa90] sm:$0xff]
    %v528 = vld [vmem:[#allocation2 + $0xa98] sm:$0xff]
    %v529 = vld [vmem:[#allocation2 + $0xaa0] sm:$0xff]
    %v530 = vld [vmem:[#allocation2 + $0xaa8] sm:$0xff]
    %v531 = vld [vmem:[#allocation2 + $0xab0] sm:$0xff]
    %v532 = vld [vmem:[#allocation2 + $0xab8] sm:$0xff]
    %v533 = vld [vmem:[#allocation2 + $0xac0] sm:$0xff]
    %v534 = vld [vmem:[#allocation2 + $0xac8] sm:$0xff]
    %v535 = vld [vmem:[#allocation2 + $0xad0] sm:$0xff]
    %v536 = vld [vmem:[#allocation2 + $0xad8] sm:$0xff]
    %v537 = vld [vmem:[#allocation2 + $0xae0] sm:$0xff]
    %v538 = vld [vmem:[#allocation2 + $0xae8] sm:$0xff]
    %v539 = vld [vmem:[#allocation2 + $0xaf0] sm:$0xff]
    %v540 = vld [vmem:[#allocation2 + $0xaf8] sm:$0xff]
    %v541 = vld [vmem:[#allocation2 + $0xb00] sm:$0xff]
    %v542 = vld [vmem:[#allocation2 + $0xb08] sm:$0xff]
    %v543 = vld [vmem:[#allocation2 + $0xb10] sm:$0xff]
    %v544 = vld [vmem:[#allocation2 + $0xb18] sm:$0xff]
    %v545 = vld [vmem:[#allocation2 + $0xb20] sm:$0xff]
    %v546 = vld [vmem:[#allocation2 + $0xb28] sm:$0xff]
    %v547 = vld [vmem:[#allocation2 + $0xb30] sm:$0xff]
    %v548 = vld [vmem:[#allocation2 + $0xb38] sm:$0xff]
    %v549 = vld [vmem:[#allocation2 + $0xb40] sm:$0xff]
    %v550 = vld [vmem:[#allocation2 + $0xb48] sm:$0xff]
    %v551 = vld [vmem:[#allocation2 + $0xb50] sm:$0xff]
    %v552 = vld [vmem:[#allocation2 + $0xb58] sm:$0xff]
    %v553 = vld [vmem:[#allocation2 + $0xb60] sm:$0xff]
    %v554 = vld [vmem:[#allocation2 + $0xb68] sm:$0xff]
    %v555 = vld [vmem:[#allocation2 + $0xb70] sm:$0xff]
    %v556 = vld [vmem:[#allocation2 + $0xb78] sm:$0xff]
    %v557 = vld [vmem:[#allocation2 + $0xb80] sm:$0xff]
    %v558 = vld [vmem:[#allocation2 + $0xb88] sm:$0xff]
    %v559 = vld [vmem:[#allocation2 + $0xb90] sm:$0xff]
    %v560 = vld [vmem:[#allocation2 + $0xb98] sm:$0xff]
    %v561 = vld [vmem:[#allocation2 + $0xba0] sm:$0xff]
    %v562 = vld [vmem:[#allocation2 + $0xba8] sm:$0xff]
    %v563 = vld [vmem:[#allocation2 + $0xbb0] sm:$0xff]
    %v564 = vld [vmem:[#allocation2 + $0xbb8] sm:$0xff]
    %v565 = vld [vmem:[#allocation2 + $0xbc0] sm:$0xff]
    %v566 = vld [vmem:[#allocation2 + $0xbc8] sm:$0xff]
    %v567 = vld [vmem:[#allocation2 + $0xbd0] sm:$0xff]
    %v568 = vld [vmem:[#allocation2 + $0xbd8] sm:$0xff]
    %v569 = vld [vmem:[#allocation2 + $0xbe0] sm:$0xff]
    %v570 = vld [vmem:[#allocation2 + $0xbe8] sm:$0xff]
    %v571 = vld [vmem:[#allocation2 + $0xbf0] sm:$0xff]
    %v572 = vld [vmem:[#allocation2 + $0xbf8] sm:$0xff]
    %v573 = vld [vmem:[#allocation2 + $0xc00] sm:$0xff]
    %v574 = vld [vmem:[#allocation2 + $0xc08] sm:$0xff]
    %v575 = vld [vmem:[#allocation2 + $0xc10] sm:$0xff]
    %v576 = vld [vmem:[#allocation2 + $0xc18] sm:$0xff]
    %v577 = vld [vmem:[#allocation2 + $0xc20] sm:$0xff]
    %v578 = vld [vmem:[#allocation2 + $0xc28] sm:$0xff]
    %v579 = vld [vmem:[#allocation2 + $0xc30] sm:$0xff]
    %v580 = vld [vmem:[#allocation2 + $0xc38] sm:$0xff]
    %v581 = vld [vmem:[#allocation2 + $0xc40] sm:$0xff]
    %v582 = vld [vmem:[#allocation2 + $0xc48] sm:$0xff]
    %v583 = vld [vmem:[#allocation2 + $0xc50] sm:$0xff]
    %v584 = vld [vmem:[#allocation2 + $0xc58] sm:$0xff]
    %v585 = vld [vmem:[#allocation2 + $0xc60] sm:$0xff]
    %v586 = vld [vmem:[#allocation2 + $0xc68] sm:$0xff]
    %v587 = vld [vmem:[#allocation2 + $0xc70] sm:$0xff]
    %v588 = vld [vmem:[#allocation2 + $0xc78] sm:$0xff]
    %v589 = vld [vmem:[#allocation2 + $0xc80] sm:$0xff]
    %v590 = vld [vmem:[#allocation2 + $0xc88] sm:$0xff]
    %v591 = vld [vmem:[#allocation2 + $0xc90] sm:$0xff]
    %v592 = vld [vmem:[#allocation2 + $0xc98] sm:$0xff]
    %v593 = vld [vmem:[#allocation2 + $0xca0] sm:$0xff]
    %v594 = vld [vmem:[#allocation2 + $0xca8] sm:$0xff]
    %v595 = vld [vmem:[#allocation2 + $0xcb0] sm:$0xff]
    %v596 = vld [vmem:[#allocation2 + $0xcb8] sm:$0xff]
    %v597 = vld [vmem:[#allocation2 + $0xcc0] sm:$0xff]
    %v598 = vld [vmem:[#allocation2 + $0xcc8] sm:$0xff]
    %v599 = vld [vmem:[#allocation2 + $0xcd0] sm:$0xff]
    %v600 = vld [vmem:[#allocation2 + $0xcd8] sm:$0xff]
    %v601 = vld [vmem:[#allocation2 + $0xce0] sm:$0xff]
    %v602 = vld [vmem:[#allocation2 + $0xce8] sm:$0xff]
    %v603 = vld [vmem:[#allocation2 + $0xcf0] sm:$0xff]
    %v604 = vld [vmem:[#allocation2 + $0xcf8] sm:$0xff]
    %v605 = vld [vmem:[#allocation2 + $0xd00] sm:$0xff]
    %v606 = vld [vmem:[#allocation2 + $0xd08] sm:$0xff]
    %v607 = vld [vmem:[#allocation2 + $0xd10] sm:$0xff]
    %v608 = vld [vmem:[#allocation2 + $0xd18] sm:$0xff]
    %v609 = vld [vmem:[#allocation2 + $0xd20] sm:$0xff]
    %v610 = vld [vmem:[#allocation2 + $0xd28] sm:$0xff]
    %v611 = vld [vmem:[#allocation2 + $0xd30] sm:$0xff]
    %v612 = vld [vmem:[#allocation2 + $0xd38] sm:$0xff]
    %v613 = vld [vmem:[#allocation2 + $0xd40] sm:$0xff]
    %v614 = vld [vmem:[#allocation2 + $0xd48] sm:$0xff]
    %v615 = vld [vmem:[#allocation2 + $0xd50] sm:$0xff]
    %v616 = vld [vmem:[#allocation2 + $0xd58] sm:$0xff]
    %v617 = vld [vmem:[#allocation2 + $0xd60] sm:$0xff]
    %v618 = vld [vmem:[#allocation2 + $0xd68] sm:$0xff]
    %v619 = vld [vmem:[#allocation2 + $0xd70] sm:$0xff]
    %v620 = vld [vmem:[#allocation2 + $0xd78] sm:$0xff]
    %v621 = vld [vmem:[#allocation2 + $0xd80] sm:$0xff]
    %v622 = vld [vmem:[#allocation2 + $0xd88] sm:$0xff]
    %v623 = vld [vmem:[#allocation2 + $0xd90] sm:$0xff]
    %v624 = vld [vmem:[#allocation2 + $0xd98] sm:$0xff]
    %v625 = vld [vmem:[#allocation2 + $0xda0] sm:$0xff]
    %v626 = vld [vmem:[#allocation2 + $0xda8] sm:$0xff]
    %v627 = vld [vmem:[#allocation2 + $0xdb0] sm:$0xff]
    %v628 = vld [vmem:[#allocation2 + $0xdb8] sm:$0xff]
    %v629 = vld [vmem:[#allocation2 + $0xdc0] sm:$0xff]
    %v630 = vld [vmem:[#allocation2 + $0xdc8] sm:$0xff]
    %v631 = vld [vmem:[#allocation2 + $0xdd0] sm:$0xff]
    %v632 = vld [vmem:[#allocation2 + $0xdd8] sm:$0xff]
    %v633 = vld [vmem:[#allocation2 + $0xde0] sm:$0xff]
    %v634 = vld [vmem:[#allocation2 + $0xde8] sm:$0xff]
    %v635 = vld [vmem:[#allocation2 + $0xdf0] sm:$0xff]
    %v636 = vld [vmem:[#allocation2 + $0xdf8] sm:$0xff]
    %v637 = vld [vmem:[#allocation2 + $0xe00] sm:$0xff]
    %v638 = vld [vmem:[#allocation2 + $0xe08] sm:$0xff]
    %v639 = vld [vmem:[#allocation2 + $0xe10] sm:$0xff]
    %v640 = vld [vmem:[#allocation2 + $0xe18] sm:$0xff]
    %v641 = vld [vmem:[#allocation2 + $0xe20] sm:$0xff]
    %v642 = vld [vmem:[#allocation2 + $0xe28] sm:$0xff]
    %v643 = vld [vmem:[#allocation2 + $0xe30] sm:$0xff]
    %v644 = vld [vmem:[#allocation2 + $0xe38] sm:$0xff]
    %v645 = vld [vmem:[#allocation2 + $0xe40] sm:$0xff]
    %v646 = vld [vmem:[#allocation2 + $0xe48] sm:$0xff]
    %v647 = vld [vmem:[#allocation2 + $0xe50] sm:$0xff]
    %v648 = vld [vmem:[#allocation2 + $0xe58] sm:$0xff]
    %v649 = vld [vmem:[#allocation2 + $0xe60] sm:$0xff]
    %v650 = vld [vmem:[#allocation2 + $0xe68] sm:$0xff]
    %v651 = vld [vmem:[#allocation2 + $0xe70] sm:$0xff]
    %v652 = vld [vmem:[#allocation2 + $0xe78] sm:$0xff]
    %v653 = vld [vmem:[#allocation2 + $0xe80] sm:$0xff]
    %v654 = vld [vmem:[#allocation2 + $0xe88] sm:$0xff]
    %v655 = vld [vmem:[#allocation2 + $0xe90] sm:$0xff]
    %v656 = vld [vmem:[#allocation2 + $0xe98] sm:$0xff]
    %v657 = vld [vmem:[#allocation2 + $0xea0] sm:$0xff]
    %v658 = vld [vmem:[#allocation2 + $0xea8] sm:$0xff]
    %v659 = vld [vmem:[#allocation2 + $0xeb0] sm:$0xff]
    %v660 = vld [vmem:[#allocation2 + $0xeb8] sm:$0xff]
    %v661 = vld [vmem:[#allocation2 + $0xec0] sm:$0xff]
    %v662 = vld [vmem:[#allocation2 + $0xec8] sm:$0xff]
    %v663 = vld [vmem:[#allocation2 + $0xed0] sm:$0xff]
    %v664 = vld [vmem:[#allocation2 + $0xed8] sm:$0xff]
    %v665 = vld [vmem:[#allocation2 + $0xee0] sm:$0xff]
    %v666 = vld [vmem:[#allocation2 + $0xee8] sm:$0xff]
    %v667 = vld [vmem:[#allocation2 + $0xef0] sm:$0xff]
    %v668 = vld [vmem:[#allocation2 + $0xef8] sm:$0xff]
    %v669 = vld [vmem:[#allocation2 + $0xf00] sm:$0xff]
    %v670 = vld [vmem:[#allocation2 + $0xf08] sm:$0xff]
    %v671 = vld [vmem:[#allocation2 + $0xf10] sm:$0xff]
    %v672 = vld [vmem:[#allocation2 + $0xf18] sm:$0xff]
    %v673 = vld [vmem:[#allocation2 + $0xf20] sm:$0xff]
    %v674 = vld [vmem:[#allocation2 + $0xf28] sm:$0xff]
    %v675 = vld [vmem:[#allocation2 + $0xf30] sm:$0xff]
    %v676 = vld [vmem:[#allocation2 + $0xf38] sm:$0xff]
    %v677 = vld [vmem:[#allocation2 + $0xf40] sm:$0xff]
    %v678 = vld [vmem:[#allocation2 + $0xf48] sm:$0xff]
    %v679 = vld [vmem:[#allocation2 + $0xf50] sm:$0xff]
    %v680 = vld [vmem:[#allocation2 + $0xf58] sm:$0xff]
    %v681 = vld [vmem:[#allocation2 + $0xf60] sm:$0xff]
    %v682 = vld [vmem:[#allocation2 + $0xf68] sm:$0xff]
    %v683 = vld [vmem:[#allocation2 + $0xf70] sm:$0xff]
    %v684 = vld [vmem:[#allocation2 + $0xf78] sm:$0xff]
    %v685 = vld [vmem:[#allocation2 + $0xf80] sm:$0xff]
    %v686 = vld [vmem:[#allocation2 + $0xf88] sm:$0xff]
    %v687 = vld [vmem:[#allocation2 + $0xf90] sm:$0xff]
    %v688 = vld [vmem:[#allocation2 + $0xf98] sm:$0xff]
    %v689 = vld [vmem:[#allocation2 + $0xfa0] sm:$0xff]
    %v690 = vld [vmem:[#allocation2 + $0xfa8] sm:$0xff]
    %v691 = vld [vmem:[#allocation2 + $0xfb0] sm:$0xff]
    %v692 = vld [vmem:[#allocation2 + $0xfb8] sm:$0xff]
    %v693 = vld [vmem:[#allocation2 + $0xfc0] sm:$0xff]
    %v694 = vld [vmem:[#allocation2 + $0xfc8] sm:$0xff]
    %v695 = vld [vmem:[#allocation2 + $0xfd0] sm:$0xff]
    %v696 = vld [vmem:[#allocation2 + $0xfd8] sm:$0xff]
    %v697 = vld [vmem:[#allocation2 + $0xfe0] sm:$0xff]
    %v698 = vld [vmem:[#allocation2 + $0xfe8] sm:$0xff]
    %v699 = vld [vmem:[#allocation2 + $0xff0] sm:$0xff]
    %v700 = vld [vmem:[#allocation2 + $0xff8] sm:$0xff]
    %v701 = vld [vmem:[#allocation4] sm:$0xf]
    %v703 = vlaneseq
    %v704 = vshrl.u32 %v703, 7
    %v705 = vsub.s32 0, %v704
    %v706 = vrot.slane %v701, %v705
    %v707 = vlaneseq
    %v708 = vshrl.u32 %v707, 7
    %v709 = vsub.s32 1, %v708
    %v710 = vrot.slane %v701, %v709
    %v711 = vlaneseq
    %v712 = vshrl.u32 %v711, 7
    %v713 = vsub.s32 2, %v712
    %v714 = vrot.slane %v701, %v713
    %v715 = vlaneseq
    %v716 = vshrl.u32 %v715, 7
    %v717 = vsub.s32 3, %v716
    %v718 = vrot.slane %v701, %v717
    %723 = vmatprep.subr.mxu0 %v190
    %724 = vmatpush1.msra.mxu0 %v189
    %725 = vmatprep.subr.mxu0 %v194
    %726 = vmatpush1.msra.mxu0 %v193
    %727 = vmatprep.subr.mxu0 %v198
    %728 = vmatpush1.msra.mxu0 %v197
    %729 = vmatprep.subr.mxu0 %v202
    %730 = vmatpush1.msra.mxu0 %v201
    %731 = vmatprep.subr.mxu0 %v206
    %732 = vmatpush1.msra.mxu0 %v205
    %733 = vmatprep.subr.mxu0 %v210
    %734 = vmatpush1.msra.mxu0 %v209
    %735 = vmatprep.subr.mxu0 %v214
    %736 = vmatpush1.msra.mxu0 %v213
    %737 = vmatprep.subr.mxu0 %v218
    %738 = vmatpush1.msra.mxu0 %v217
    %739 = vmatprep.subr.mxu0 %v222
    %740 = vmatpush1.msra.mxu0 %v221
    %741 = vmatprep.subr.mxu0 %v226
    %742 = vmatpush1.msra.mxu0 %v225
    %743 = vmatprep.subr.mxu0 %v230
    %744 = vmatpush1.msra.mxu0 %v229
    %745 = vmatprep.subr.mxu0 %v234
    %746 = vmatpush1.msra.mxu0 %v233
    %747 = vmatprep.subr.mxu0 %v238
    %748 = vmatpush1.msra.mxu0 %v237
    %749 = vmatprep.subr.mxu0 %v242
    %750 = vmatpush1.msra.mxu0 %v241
    %751 = vmatprep.subr.mxu0 %v246
    %752 = vmatpush1.msra.mxu0 %v245
    %753 = vmatprep.subr.mxu0 %v250
    %754 = vmatpush1.msra.mxu0 %v249
    %755 = vmatprep.subr.mxu0 %v254
    %756 = vmatpush1.msra.mxu0 %v253
    %757 = vmatprep.subr.mxu0 %v258
    %758 = vmatpush1.msra.mxu0 %v257
    %759 = vmatprep.subr.mxu0 %v262
    %760 = vmatpush1.msra.mxu0 %v261
    %761 = vmatprep.subr.mxu0 %v266
    %762 = vmatpush1.msra.mxu0 %v265
    %763 = vmatprep.subr.mxu0 %v270
    %764 = vmatpush1.msra.mxu0 %v269
    %765 = vmatprep.subr.mxu0 %v274
    %766 = vmatpush1.msra.mxu0 %v273
    %767 = vmatprep.subr.mxu0 %v278
    %768 = vmatpush1.msra.mxu0 %v277
    %769 = vmatprep.subr.mxu0 %v282
    %770 = vmatpush1.msra.mxu0 %v281
    %771 = vmatprep.subr.mxu0 %v286
    %772 = vmatpush1.msra.mxu0 %v285
    %773 = vmatprep.subr.mxu0 %v290
    %774 = vmatpush1.msra.mxu0 %v289
    %775 = vmatprep.subr.mxu0 %v294
    %776 = vmatpush1.msra.mxu0 %v293
    %777 = vmatprep.subr.mxu0 %v298
    %778 = vmatpush1.msra.mxu0 %v297
    %779 = vmatprep.subr.mxu0 %v302
    %780 = vmatpush1.msra.mxu0 %v301
    %781 = vmatprep.subr.mxu0 %v306
    %782 = vmatpush1.msra.mxu0 %v305
    %783 = vmatprep.subr.mxu0 %v310
    %784 = vmatpush1.msra.mxu0 %v309
    %785 = vmatprep.subr.mxu0 %v314
    %786 = vmatpush1.msra.mxu0 %v313
    %787 = vmatprep.mubr.f32.mxu0 %v182
    %788 = vmatmul.mubr.f32.gmra.mrb[0].mxu0 %v181
    %v789 = vpop.f32.mrb[0].mxu0
    %v790 = vadd.f32 %v706, %v789
    %v791 = vpop.f32.mrb[0].mxu0
    %v792 = vadd.f32 %v710, %v791
    %793 = vdwg.mxu0
    %794 = vmatprep.subr.mxu0 %v318
    %795 = vmatpush1.msra.mxu0 %v317
    %796 = vmatprep.subr.mxu0 %v322
    %797 = vmatpush1.msra.mxu0 %v321
    %798 = vmatprep.subr.mxu0 %v326
    %799 = vmatpush1.msra.mxu0 %v325
    %800 = vmatprep.subr.mxu0 %v330
    %801 = vmatpush1.msra.mxu0 %v329
    %802 = vmatprep.subr.mxu0 %v334
    %803 = vmatpush1.msra.mxu0 %v333
    %804 = vmatprep.subr.mxu0 %v338
    %805 = vmatpush1.msra.mxu0 %v337
    %806 = vmatprep.subr.mxu0 %v342
    %807 = vmatpush1.msra.mxu0 %v341
    %808 = vmatprep.subr.mxu0 %v346
    %809 = vmatpush1.msra.mxu0 %v345
    %810 = vmatprep.subr.mxu0 %v350
    %811 = vmatpush1.msra.mxu0 %v349
    %812 = vmatprep.subr.mxu0 %v354
    %813 = vmatpush1.msra.mxu0 %v353
    %814 = vmatprep.subr.mxu0 %v358
    %815 = vmatpush1.msra.mxu0 %v357
    %816 = vmatprep.subr.mxu0 %v362
    %817 = vmatpush1.msra.mxu0 %v361
    %818 = vmatprep.subr.mxu0 %v366
    %819 = vmatpush1.msra.mxu0 %v365
    %820 = vmatprep.subr.mxu0 %v370
    %821 = vmatpush1.msra.mxu0 %v369
    %822 = vmatprep.subr.mxu0 %v374
    %823 = vmatpush1.msra.mxu0 %v373
    %824 = vmatprep.subr.mxu0 %v378
    %825 = vmatpush1.msra.mxu0 %v377
    %826 = vmatprep.subr.mxu0 %v382
    %827 = vmatpush1.msra.mxu0 %v381
    %828 = vmatprep.subr.mxu0 %v386
    %829 = vmatpush1.msra.mxu0 %v385
    %830 = vmatprep.subr.mxu0 %v390
    %831 = vmatpush1.msra.mxu0 %v389
    %832 = vmatprep.subr.mxu0 %v394
    %833 = vmatpush1.msra.mxu0 %v393
    %834 = vmatprep.subr.mxu0 %v398
    %835 = vmatpush1.msra.mxu0 %v397
    %836 = vmatprep.subr.mxu0 %v402
    %837 = vmatpush1.msra.mxu0 %v401
    %838 = vmatprep.subr.mxu0 %v406
    %839 = vmatpush1.msra.mxu0 %v405
    %840 = vmatprep.subr.mxu0 %v410
    %841 = vmatpush1.msra.mxu0 %v409
    %842 = vmatprep.subr.mxu0 %v414
    %843 = vmatpush1.msra.mxu0 %v413
    %844 = vmatprep.subr.mxu0 %v418
    %845 = vmatpush1.msra.mxu0 %v417
    %846 = vmatprep.subr.mxu0 %v422
    %847 = vmatpush1.msra.mxu0 %v421
    %848 = vmatprep.subr.mxu0 %v426
    %849 = vmatpush1.msra.mxu0 %v425
    %850 = vmatprep.subr.mxu0 %v430
    %851 = vmatpush1.msra.mxu0 %v429
    %852 = vmatprep.subr.mxu0 %v434
    %853 = vmatpush1.msra.mxu0 %v433
    %854 = vmatprep.subr.mxu0 %v438
    %855 = vmatpush1.msra.mxu0 %v437
    %856 = vmatprep.subr.mxu0 %v442
    %857 = vmatpush1.msra.mxu0 %v441
    %858 = vmatprep.mubr.f32.mxu0 %v184
    %859 = vmatmul.mubr.f32.gmra.mrb[0].mxu0 %v183
    %v860 = vpop.f32.mrb[0].mxu0
    %v861 = vadd.f32 %v790, %v860
    %v862 = vpop.f32.mrb[0].mxu0
    %v863 = vadd.f32 %v792, %v862
    %864 = vdwg.mxu0
    %865 = vmatprep.subr.mxu0 %v446
    %866 = vmatpush1.msra.mxu0 %v445
    %867 = vmatprep.subr.mxu0 %v450
    %868 = vmatpush1.msra.mxu0 %v449
    %869 = vmatprep.subr.mxu0 %v454
    %870 = vmatpush1.msra.mxu0 %v453
    %871 = vmatprep.subr.mxu0 %v458
    %872 = vmatpush1.msra.mxu0 %v457
    %873 = vmatprep.subr.mxu0 %v462
    %874 = vmatpush1.msra.mxu0 %v461
    %875 = vmatprep.subr.mxu0 %v466
    %876 = vmatpush1.msra.mxu0 %v465
    %877 = vmatprep.subr.mxu0 %v470
    %878 = vmatpush1.msra.mxu0 %v469
    %879 = vmatprep.subr.mxu0 %v474
    %880 = vmatpush1.msra.mxu0 %v473
    %881 = vmatprep.subr.mxu0 %v478
    %882 = vmatpush1.msra.mxu0 %v477
    %883 = vmatprep.subr.mxu0 %v482
    %884 = vmatpush1.msra.mxu0 %v481
    %885 = vmatprep.subr.mxu0 %v486
    %886 = vmatpush1.msra.mxu0 %v485
    %887 = vmatprep.subr.mxu0 %v490
    %888 = vmatpush1.msra.mxu0 %v489
    %889 = vmatprep.subr.mxu0 %v494
    %890 = vmatpush1.msra.mxu0 %v493
    %891 = vmatprep.subr.mxu0 %v498
    %892 = vmatpush1.msra.mxu0 %v497
    %893 = vmatprep.subr.mxu0 %v502
    %894 = vmatpush1.msra.mxu0 %v501
    %895 = vmatprep.subr.mxu0 %v506
    %896 = vmatpush1.msra.mxu0 %v505
    %897 = vmatprep.subr.mxu0 %v510
    %898 = vmatpush1.msra.mxu0 %v509
    %899 = vmatprep.subr.mxu0 %v514
    %900 = vmatpush1.msra.mxu0 %v513
    %901 = vmatprep.subr.mxu0 %v518
    %902 = vmatpush1.msra.mxu0 %v517
    %903 = vmatprep.subr.mxu0 %v522
    %904 = vmatpush1.msra.mxu0 %v521
    %905 = vmatprep.subr.mxu0 %v526
    %906 = vmatpush1.msra.mxu0 %v525
    %907 = vmatprep.subr.mxu0 %v530
    %908 = vmatpush1.msra.mxu0 %v529
    %909 = vmatprep.subr.mxu0 %v534
    %910 = vmatpush1.msra.mxu0 %v533
    %911 = vmatprep.subr.mxu0 %v538
    %912 = vmatpush1.msra.mxu0 %v537
    %913 = vmatprep.subr.mxu0 %v542
    %914 = vmatpush1.msra.mxu0 %v541
    %915 = vmatprep.subr.mxu0 %v546
    %916 = vmatpush1.msra.mxu0 %v545
    %917 = vmatprep.subr.mxu0 %v550
    %918 = vmatpush1.msra.mxu0 %v549
    %919 = vmatprep.subr.mxu0 %v554
    %920 = vmatpush1.msra.mxu0 %v553
    %921 = vmatprep.subr.mxu0 %v558
    %922 = vmatpush1.msra.mxu0 %v557
    %923 = vmatprep.subr.mxu0 %v562
    %924 = vmatpush1.msra.mxu0 %v561
    %925 = vmatprep.subr.mxu0 %v566
    %926 = vmatpush1.msra.mxu0 %v565
    %927 = vmatprep.subr.mxu0 %v570
    %928 = vmatpush1.msra.mxu0 %v569
    %929 = vmatprep.mubr.f32.mxu0 %v186
    %930 = vmatmul.mubr.f32.gmra.mrb[0].mxu0 %v185
    %v931 = vpop.f32.mrb[0].mxu0
    %v932 = vadd.f32 %v861, %v931
    %v933 = vpop.f32.mrb[0].mxu0
    %v934 = vadd.f32 %v863, %v933
    %935 = vdwg.mxu0
    %936 = vmatprep.subr.mxu0 %v574
    %937 = vmatpush1.msra.mxu0 %v573
    %938 = vmatprep.subr.mxu0 %v578
    %939 = vmatpush1.msra.mxu0 %v577
    %940 = vmatprep.subr.mxu0 %v582
    %941 = vmatpush1.msra.mxu0 %v581
    %942 = vmatprep.subr.mxu0 %v586
    %943 = vmatpush1.msra.mxu0 %v585
    %944 = vmatprep.subr.mxu0 %v590
    %945 = vmatpush1.msra.mxu0 %v589
    %946 = vmatprep.subr.mxu0 %v594
    %947 = vmatpush1.msra.mxu0 %v593
    %948 = vmatprep.subr.mxu0 %v598
    %949 = vmatpush1.msra.mxu0 %v597
    %950 = vmatprep.subr.mxu0 %v602
    %951 = vmatpush1.msra.mxu0 %v601
    %952 = vmatprep.subr.mxu0 %v606
    %953 = vmatpush1.msra.mxu0 %v605
    %954 = vmatprep.subr.mxu0 %v610
    %955 = vmatpush1.msra.mxu0 %v609
    %956 = vmatprep.subr.mxu0 %v614
    %957 = vmatpush1.msra.mxu0 %v613
    %958 = vmatprep.subr.mxu0 %v618
    %959 = vmatpush1.msra.mxu0 %v617
    %960 = vmatprep.subr.mxu0 %v622
    %961 = vmatpush1.msra.mxu0 %v621
    %962 = vmatprep.subr.mxu0 %v626
    %963 = vmatpush1.msra.mxu0 %v625
    %964 = vmatprep.subr.mxu0 %v630
    %965 = vmatpush1.msra.mxu0 %v629
    %966 = vmatprep.subr.mxu0 %v634
    %967 = vmatpush1.msra.mxu0 %v633
    %968 = vmatprep.subr.mxu0 %v638
    %969 = vmatpush1.msra.mxu0 %v637
    %970 = vmatprep.subr.mxu0 %v642
    %971 = vmatpush1.msra.mxu0 %v641
    %972 = vmatprep.subr.mxu0 %v646
    %973 = vmatpush1.msra.mxu0 %v645
    %974 = vmatprep.subr.mxu0 %v650
    %975 = vmatpush1.msra.mxu0 %v649
    %976 = vmatprep.subr.mxu0 %v654
    %977 = vmatpush1.msra.mxu0 %v653
    %978 = vmatprep.subr.mxu0 %v658
    %979 = vmatpush1.msra.mxu0 %v657
    %980 = vmatprep.subr.mxu0 %v662
    %981 = vmatpush1.msra.mxu0 %v661
    %982 = vmatprep.subr.mxu0 %v666
    %983 = vmatpush1.msra.mxu0 %v665
    %984 = vmatprep.subr.mxu0 %v670
    %985 = vmatpush1.msra.mxu0 %v669
    %986 = vmatprep.subr.mxu0 %v674
    %987 = vmatpush1.msra.mxu0 %v673
    %988 = vmatprep.subr.mxu0 %v678
    %989 = vmatpush1.msra.mxu0 %v677
    %990 = vmatprep.subr.mxu0 %v682
    %991 = vmatpush1.msra.mxu0 %v681
    %992 = vmatprep.subr.mxu0 %v686
    %993 = vmatpush1.msra.mxu0 %v685
    %994 = vmatprep.subr.mxu0 %v690
    %995 = vmatpush1.msra.mxu0 %v689
    %996 = vmatprep.subr.mxu0 %v694
    %997 = vmatpush1.msra.mxu0 %v693
    %998 = vmatprep.subr.mxu0 %v698
    %999 = vmatpush1.msra.mxu0 %v697
    %1000 = vmatprep.mubr.f32.mxu0 %v188
    %1001 = vmatmul.mubr.f32.gmra.mrb[0].mxu0 %v187
    %v1002 = vpop.f32.mrb[0].mxu0
    %v1003 = vadd.f32 %v932, %v1002
    %v1004 = vpop.f32.mrb[0].mxu0
    %v1005 = vadd.f32 %v934, %v1004
    %1006 = vdwg.mxu0
    %1007 = vmatprep.subr.mxu0 %v192
    %1008 = vmatpush1.msra.mxu0 %v191
    %1009 = vmatprep.subr.mxu0 %v196
    %1010 = vmatpush1.msra.mxu0 %v195
    %1011 = vmatprep.subr.mxu0 %v200
    %1012 = vmatpush1.msra.mxu0 %v199
    %1013 = vmatprep.subr.mxu0 %v204
    %1014 = vmatpush1.msra.mxu0 %v203
    %1015 = vmatprep.subr.mxu0 %v208
    %1016 = vmatpush1.msra.mxu0 %v207
    %1017 = vmatprep.subr.mxu0 %v212
    %1018 = vmatpush1.msra.mxu0 %v211
    %1019 = vmatprep.subr.mxu0 %v216
    %1020 = vmatpush1.msra.mxu0 %v215
    %1021 = vmatprep.subr.mxu0 %v220
    %1022 = vmatpush1.msra.mxu0 %v219
    %1023 = vmatprep.subr.mxu0 %v224
    %1024 = vmatpush1.msra.mxu0 %v223
    %1025 = vmatprep.subr.mxu0 %v228
    %1026 = vmatpush1.msra.mxu0 %v227
    %1027 = vmatprep.subr.mxu0 %v232
    %1028 = vmatpush1.msra.mxu0 %v231
    %1029 = vmatprep.subr.mxu0 %v236
    %1030 = vmatpush1.msra.mxu0 %v235
    %1031 = vmatprep.subr.mxu0 %v240
    %1032 = vmatpush1.msra.mxu0 %v239
    %1033 = vmatprep.subr.mxu0 %v244
    %1034 = vmatpush1.msra.mxu0 %v243
    %1035 = vmatprep.subr.mxu0 %v248
    %1036 = vmatpush1.msra.mxu0 %v247
    %1037 = vmatprep.subr.mxu0 %v252
    %1038 = vmatpush1.msra.mxu0 %v251
    %1039 = vmatprep.subr.mxu0 %v256
    %1040 = vmatpush1.msra.mxu0 %v255
    %1041 = vmatprep.subr.mxu0 %v260
    %1042 = vmatpush1.msra.mxu0 %v259
    %1043 = vmatprep.subr.mxu0 %v264
    %1044 = vmatpush1.msra.mxu0 %v263
    %1045 = vmatprep.subr.mxu0 %v268
    %1046 = vmatpush1.msra.mxu0 %v267
    %1047 = vmatprep.subr.mxu0 %v272
    %1048 = vmatpush1.msra.mxu0 %v271
    %1049 = vmatprep.subr.mxu0 %v276
    %1050 = vmatpush1.msra.mxu0 %v275
    %1051 = vmatprep.subr.mxu0 %v280
    %1052 = vmatpush1.msra.mxu0 %v279
    %1053 = vmatprep.subr.mxu0 %v284
    %1054 = vmatpush1.msra.mxu0 %v283
    %1055 = vmatprep.subr.mxu0 %v288
    %1056 = vmatpush1.msra.mxu0 %v287
    %1057 = vmatprep.subr.mxu0 %v292
    %1058 = vmatpush1.msra.mxu0 %v291
    %1059 = vmatprep.subr.mxu0 %v296
    %1060 = vmatpush1.msra.mxu0 %v295
    %1061 = vmatprep.subr.mxu0 %v300
    %1062 = vmatpush1.msra.mxu0 %v299
    %1063 = vmatprep.subr.mxu0 %v304
    %1064 = vmatpush1.msra.mxu0 %v303
    %1065 = vmatprep.subr.mxu0 %v308
    %1066 = vmatpush1.msra.mxu0 %v307
    %1067 = vmatprep.subr.mxu0 %v312
    %1068 = vmatpush1.msra.mxu0 %v311
    %1069 = vmatprep.subr.mxu0 %v316
    %1070 = vmatpush1.msra.mxu0 %v315
    %1071 = vmatprep.mubr.f32.mxu0 %v182
    %1072 = vmatmul.mubr.f32.gmra.mrb[0].mxu0 %v181
    %v1073 = vpop.f32.mrb[0].mxu0
    %v1074 = vadd.f32 %v714, %v1073
    %v1075 = vpop.f32.mrb[0].mxu0
    %v1076 = vadd.f32 %v718, %v1075
    %1077 = vdwg.mxu0
    %1078 = vmatprep.subr.mxu0 %v320
    %1079 = vmatpush1.msra.mxu0 %v319
    %1080 = vmatprep.subr.mxu0 %v324
    %1081 = vmatpush1.msra.mxu0 %v323
    %1082 = vmatprep.subr.mxu0 %v328
    %1083 = vmatpush1.msra.mxu0 %v327
    %1084 = vmatprep.subr.mxu0 %v332
    %1085 = vmatpush1.msra.mxu0 %v331
    %1086 = vmatprep.subr.mxu0 %v336
    %1087 = vmatpush1.msra.mxu0 %v335
    %1088 = vmatprep.subr.mxu0 %v340
    %1089 = vmatpush1.msra.mxu0 %v339
    %1090 = vmatprep.subr.mxu0 %v344
    %1091 = vmatpush1.msra.mxu0 %v343
    %1092 = vmatprep.subr.mxu0 %v348
    %1093 = vmatpush1.msra.mxu0 %v347
    %1094 = vmatprep.subr.mxu0 %v352
    %1095 = vmatpush1.msra.mxu0 %v351
    %1096 = vmatprep.subr.mxu0 %v356
    %1097 = vmatpush1.msra.mxu0 %v355
    %1098 = vmatprep.subr.mxu0 %v360
    %1099 = vmatpush1.msra.mxu0 %v359
    %1100 = vmatprep.subr.mxu0 %v364
    %1101 = vmatpush1.msra.mxu0 %v363
    %1102 = vmatprep.subr.mxu0 %v368
    %1103 = vmatpush1.msra.mxu0 %v367
    %1104 = vmatprep.subr.mxu0 %v372
    %1105 = vmatpush1.msra.mxu0 %v371
    %1106 = vmatprep.subr.mxu0 %v376
    %1107 = vmatpush1.msra.mxu0 %v375
    %1108 = vmatprep.subr.mxu0 %v380
    %1109 = vmatpush1.msra.mxu0 %v379
    %1110 = vmatprep.subr.mxu0 %v384
    %1111 = vmatpush1.msra.mxu0 %v383
    %1112 = vmatprep.subr.mxu0 %v388
    %1113 = vmatpush1.msra.mxu0 %v387
    %1114 = vmatprep.subr.mxu0 %v392
    %1115 = vmatpush1.msra.mxu0 %v391
    %1116 = vmatprep.subr.mxu0 %v396
    %1117 = vmatpush1.msra.mxu0 %v395
    %1118 = vmatprep.subr.mxu0 %v400
    %1119 = vmatpush1.msra.mxu0 %v399
    %1120 = vmatprep.subr.mxu0 %v404
    %1121 = vmatpush1.msra.mxu0 %v403
    %1122 = vmatprep.subr.mxu0 %v408
    %1123 = vmatpush1.msra.mxu0 %v407
    %1124 = vmatprep.subr.mxu0 %v412
    %1125 = vmatpush1.msra.mxu0 %v411
    %1126 = vmatprep.subr.mxu0 %v416
    %1127 = vmatpush1.msra.mxu0 %v415
    %1128 = vmatprep.subr.mxu0 %v420
    %1129 = vmatpush1.msra.mxu0 %v419
    %1130 = vmatprep.subr.mxu0 %v424
    %1131 = vmatpush1.msra.mxu0 %v423
    %1132 = vmatprep.subr.mxu0 %v428
    %1133 = vmatpush1.msra.mxu0 %v427
    %1134 = vmatprep.subr.mxu0 %v432
    %1135 = vmatpush1.msra.mxu0 %v431
    %1136 = vmatprep.subr.mxu0 %v436
    %1137 = vmatpush1.msra.mxu0 %v435
    %1138 = vmatprep.subr.mxu0 %v440
    %1139 = vmatpush1.msra.mxu0 %v439
    %1140 = vmatprep.subr.mxu0 %v444
    %1141 = vmatpush1.msra.mxu0 %v443
    %1142 = vmatprep.mubr.f32.mxu0 %v184
    %1143 = vmatmul.mubr.f32.gmra.mrb[0].mxu0 %v183
    %v1144 = vpop.f32.mrb[0].mxu0
    %v1145 = vadd.f32 %v1074, %v1144
    %v1146 = vpop.f32.mrb[0].mxu0
    %v1147 = vadd.f32 %v1076, %v1146
    %1148 = vdwg.mxu0
    %1149 = vmatprep.subr.mxu0 %v448
    %1150 = vmatpush1.msra.mxu0 %v447
    %1151 = vmatprep.subr.mxu0 %v452
    %1152 = vmatpush1.msra.mxu0 %v451
    %1153 = vmatprep.subr.mxu0 %v456
    %1154 = vmatpush1.msra.mxu0 %v455
    %1155 = vmatprep.subr.mxu0 %v460
    %1156 = vmatpush1.msra.mxu0 %v459
    %1157 = vmatprep.subr.mxu0 %v464
    %1158 = vmatpush1.msra.mxu0 %v463
    %1159 = vmatprep.subr.mxu0 %v468
    %1160 = vmatpush1.msra.mxu0 %v467
    %1161 = vmatprep.subr.mxu0 %v472
    %1162 = vmatpush1.msra.mxu0 %v471
    %1163 = vmatprep.subr.mxu0 %v476
    %1164 = vmatpush1.msra.mxu0 %v475
    %1165 = vmatprep.subr.mxu0 %v480
    %1166 = vmatpush1.msra.mxu0 %v479
    %1167 = vmatprep.subr.mxu0 %v484
    %1168 = vmatpush1.msra.mxu0 %v483
    %1169 = vmatprep.subr.mxu0 %v488
    %1170 = vmatpush1.msra.mxu0 %v487
    %1171 = vmatprep.subr.mxu0 %v492
    %1172 = vmatpush1.msra.mxu0 %v491
    %1173 = vmatprep.subr.mxu0 %v496
    %1174 = vmatpush1.msra.mxu0 %v495
    %1175 = vmatprep.subr.mxu0 %v500
    %1176 = vmatpush1.msra.mxu0 %v499
    %1177 = vmatprep.subr.mxu0 %v504
    %1178 = vmatpush1.msra.mxu0 %v503
    %1179 = vmatprep.subr.mxu0 %v508
    %1180 = vmatpush1.msra.mxu0 %v507
    %1181 = vmatprep.subr.mxu0 %v512
    %1182 = vmatpush1.msra.mxu0 %v511
    %1183 = vmatprep.subr.mxu0 %v516
    %1184 = vmatpush1.msra.mxu0 %v515
    %1185 = vmatprep.subr.mxu0 %v520
    %1186 = vmatpush1.msra.mxu0 %v519
    %1187 = vmatprep.subr.mxu0 %v524
    %1188 = vmatpush1.msra.mxu0 %v523
    %1189 = vmatprep.subr.mxu0 %v528
    %1190 = vmatpush1.msra.mxu0 %v527
    %1191 = vmatprep.subr.mxu0 %v532
    %1192 = vmatpush1.msra.mxu0 %v531
    %1193 = vmatprep.subr.mxu0 %v536
    %1194 = vmatpush1.msra.mxu0 %v535
    %1195 = vmatprep.subr.mxu0 %v540
    %1196 = vmatpush1.msra.mxu0 %v539
    %1197 = vmatprep.subr.mxu0 %v544
    %1198 = vmatpush1.msra.mxu0 %v543
    %1199 = vmatprep.subr.mxu0 %v548
    %1200 = vmatpush1.msra.mxu0 %v547
    %1201 = vmatprep.subr.mxu0 %v552
    %1202 = vmatpush1.msra.mxu0 %v551
    %1203 = vmatprep.subr.mxu0 %v556
    %1204 = vmatpush1.msra.mxu0 %v555
    %1205 = vmatprep.subr.mxu0 %v560
    %1206 = vmatpush1.msra.mxu0 %v559
    %1207 = vmatprep.subr.mxu0 %v564
    %1208 = vmatpush1.msra.mxu0 %v563
    %1209 = vmatprep.subr.mxu0 %v568
    %1210 = vmatpush1.msra.mxu0 %v567
    %1211 = vmatprep.subr.mxu0 %v572
    %1212 = vmatpush1.msra.mxu0 %v571
    %1213 = vmatprep.mubr.f32.mxu0 %v186
    %1214 = vmatmul.mubr.f32.gmra.mrb[0].mxu0 %v185
    %v1215 = vpop.f32.mrb[0].mxu0
    %v1216 = vadd.f32 %v1145, %v1215
    %v1217 = vpop.f32.mrb[0].mxu0
    %v1218 = vadd.f32 %v1147, %v1217
    %1219 = vdwg.mxu0
    %1220 = vmatprep.subr.mxu0 %v576
    %1221 = vmatpush1.msra.mxu0 %v575
    %1222 = vmatprep.subr.mxu0 %v580
    %1223 = vmatpush1.msra.mxu0 %v579
    %1224 = vmatprep.subr.mxu0 %v584
    %1225 = vmatpush1.msra.mxu0 %v583
    %1226 = vmatprep.subr.mxu0 %v588
    %1227 = vmatpush1.msra.mxu0 %v587
    %1228 = vmatprep.subr.mxu0 %v592
    %1229 = vmatpush1.msra.mxu0 %v591
    %1230 = vmatprep.subr.mxu0 %v596
    %1231 = vmatpush1.msra.mxu0 %v595
    %1232 = vmatprep.subr.mxu0 %v600
    %1233 = vmatpush1.msra.mxu0 %v599
    %1234 = vmatprep.subr.mxu0 %v604
    %1235 = vmatpush1.msra.mxu0 %v603
    %1236 = vmatprep.subr.mxu0 %v608
    %1237 = vmatpush1.msra.mxu0 %v607
    %1238 = vmatprep.subr.mxu0 %v612
    %1239 = vmatpush1.msra.mxu0 %v611
    %1240 = vmatprep.subr.mxu0 %v616
    %1241 = vmatpush1.msra.mxu0 %v615
    %1242 = vmatprep.subr.mxu0 %v620
    %1243 = vmatpush1.msra.mxu0 %v619
    %1244 = vmatprep.subr.mxu0 %v624
    %1245 = vmatpush1.msra.mxu0 %v623
    %1246 = vmatprep.subr.mxu0 %v628
    %1247 = vmatpush1.msra.mxu0 %v627
    %1248 = vmatprep.subr.mxu0 %v632
    %1249 = vmatpush1.msra.mxu0 %v631
    %1250 = vmatprep.subr.mxu0 %v636
    %1251 = vmatpush1.msra.mxu0 %v635
    %1252 = vmatprep.subr.mxu0 %v640
    %1253 = vmatpush1.msra.mxu0 %v639
    %1254 = vmatprep.subr.mxu0 %v644
    %1255 = vmatpush1.msra.mxu0 %v643
    %1256 = vmatprep.subr.mxu0 %v648
    %1257 = vmatpush1.msra.mxu0 %v647
    %1258 = vmatprep.subr.mxu0 %v652
    %1259 = vmatpush1.msra.mxu0 %v651
    %1260 = vmatprep.subr.mxu0 %v656
    %1261 = vmatpush1.msra.mxu0 %v655
    %1262 = vmatprep.subr.mxu0 %v660
    %1263 = vmatpush1.msra.mxu0 %v659
    %1264 = vmatprep.subr.mxu0 %v664
    %1265 = vmatpush1.msra.mxu0 %v663
    %1266 = vmatprep.subr.mxu0 %v668
    %1267 = vmatpush1.msra.mxu0 %v667
    %1268 = vmatprep.subr.mxu0 %v672
    %1269 = vmatpush1.msra.mxu0 %v671
    %1270 = vmatprep.subr.mxu0 %v676
    %1271 = vmatpush1.msra.mxu0 %v675
    %1272 = vmatprep.subr.mxu0 %v680
    %1273 = vmatpush1.msra.mxu0 %v679
    %1274 = vmatprep.subr.mxu0 %v684
    %1275 = vmatpush1.msra.mxu0 %v683
    %1276 = vmatprep.subr.mxu0 %v688
    %1277 = vmatpush1.msra.mxu0 %v687
    %1278 = vmatprep.subr.mxu0 %v692
    %1279 = vmatpush1.msra.mxu0 %v691
    %1280 = vmatprep.subr.mxu0 %v696
    %1281 = vmatpush1.msra.mxu0 %v695
    %1282 = vmatprep.subr.mxu0 %v700
    %1283 = vmatpush1.msra.mxu0 %v699
    %1284 = vmatprep.mubr.f32.mxu0 %v188
    %1285 = vmatmul.mubr.f32.gmra.mrb[0].mxu0 %v187
    %v1286 = vpop.f32.mrb[0].mxu0
    %v1287 = vadd.f32 %v1216, %v1286
    %v1288 = vpop.f32.mrb[0].mxu0
    %v1289 = vadd.f32 %v1218, %v1288
    %1290 = vdwg.mxu0
    %v1291 = vmax.f32 %v1003, 0.0
    %v1292 = vmax.f32 %v1005, 0.0
    %v1293 = vmax.f32 %v1287, 0.0
    %v1294 = vmax.f32 %v1289, 0.0
    %v1295 = vld [vmem:[#allocation6] sm:$0xff]
    %v1296 = vld [vmem:[#allocation6 + $0x8] sm:$0xff]
    %v1297 = vld [vmem:[#allocation6 + $0x10] sm:$0xff]
    %v1298 = vld [vmem:[#allocation6 + $0x18] sm:$0xff]
    %v1299 = vld [vmem:[#allocation6 + $0x20] sm:$0xff]
    %v1300 = vld [vmem:[#allocation6 + $0x28] sm:$0xff]
    %v1301 = vld [vmem:[#allocation6 + $0x30] sm:$0xff]
    %v1302 = vld [vmem:[#allocation6 + $0x38] sm:$0xff]
    %v1303 = vld [vmem:[#allocation6 + $0x40] sm:$0xff]
    %v1304 = vld [vmem:[#allocation6 + $0x48] sm:$0xff]
    %v1305 = vld [vmem:[#allocation6 + $0x50] sm:$0xff]
    %v1306 = vld [vmem:[#allocation6 + $0x58] sm:$0xff]
    %v1307 = vld [vmem:[#allocation6 + $0x60] sm:$0xff]
    %v1308 = vld [vmem:[#allocation6 + $0x68] sm:$0xff]
    %v1309 = vld [vmem:[#allocation6 + $0x70] sm:$0xff]
    %v1310 = vld [vmem:[#allocation6 + $0x78] sm:$0xff]
    %v1311 = vld [vmem:[#allocation6 + $0x80] sm:$0xff]
    %v1312 = vld [vmem:[#allocation6 + $0x88] sm:$0xff]
    %v1313 = vld [vmem:[#allocation6 + $0x90] sm:$0xff]
    %v1314 = vld [vmem:[#allocation6 + $0x98] sm:$0xff]
    %v1315 = vld [vmem:[#allocation6 + $0xa0] sm:$0xff]
    %v1316 = vld [vmem:[#allocation6 + $0xa8] sm:$0xff]
    %v1317 = vld [vmem:[#allocation6 + $0xb0] sm:$0xff]
    %v1318 = vld [vmem:[#allocation6 + $0xb8] sm:$0xff]
    %v1319 = vld [vmem:[#allocation6 + $0xc0] sm:$0xff]
    %v1320 = vld [vmem:[#allocation6 + $0xc8] sm:$0xff]
    %v1321 = vld [vmem:[#allocation6 + $0xd0] sm:$0xff]
    %v1322 = vld [vmem:[#allocation6 + $0xd8] sm:$0xff]
    %v1323 = vld [vmem:[#allocation6 + $0xe0] sm:$0xff]
    %v1324 = vld [vmem:[#allocation6 + $0xe8] sm:$0xff]
    %v1325 = vld [vmem:[#allocation6 + $0xf0] sm:$0xff]
    %v1326 = vld [vmem:[#allocation6 + $0xf8] sm:$0xff]
    %v1327 = vld [vmem:[#allocation6 + $0x100] sm:$0xff]
    %v1328 = vld [vmem:[#allocation6 + $0x108] sm:$0xff]
    %v1329 = vld [vmem:[#allocation6 + $0x110] sm:$0xff]
    %v1330 = vld [vmem:[#allocation6 + $0x118] sm:$0xff]
    %v1331 = vld [vmem:[#allocation6 + $0x120] sm:$0xff]
    %v1332 = vld [vmem:[#allocation6 + $0x128] sm:$0xff]
    %v1333 = vld [vmem:[#allocation6 + $0x130] sm:$0xff]
    %v1334 = vld [vmem:[#allocation6 + $0x138] sm:$0xff]
    %v1335 = vld [vmem:[#allocation6 + $0x140] sm:$0xff]
    %v1336 = vld [vmem:[#allocation6 + $0x148] sm:$0xff]
    %v1337 = vld [vmem:[#allocation6 + $0x150] sm:$0xff]
    %v1338 = vld [vmem:[#allocation6 + $0x158] sm:$0xff]
    %v1339 = vld [vmem:[#allocation6 + $0x160] sm:$0xff]
    %v1340 = vld [vmem:[#allocation6 + $0x168] sm:$0xff]
    %v1341 = vld [vmem:[#allocation6 + $0x170] sm:$0xff]
    %v1342 = vld [vmem:[#allocation6 + $0x178] sm:$0xff]
    %v1343 = vld [vmem:[#allocation6 + $0x180] sm:$0xff]
    %v1344 = vld [vmem:[#allocation6 + $0x188] sm:$0xff]
    %v1345 = vld [vmem:[#allocation6 + $0x190] sm:$0xff]
    %v1346 = vld [vmem:[#allocation6 + $0x198] sm:$0xff]
    %v1347 = vld [vmem:[#allocation6 + $0x1a0] sm:$0xff]
    %v1348 = vld [vmem:[#allocation6 + $0x1a8] sm:$0xff]
    %v1349 = vld [vmem:[#allocation6 + $0x1b0] sm:$0xff]
    %v1350 = vld [vmem:[#allocation6 + $0x1b8] sm:$0xff]
    %v1351 = vld [vmem:[#allocation6 + $0x1c0] sm:$0xff]
    %v1352 = vld [vmem:[#allocation6 + $0x1c8] sm:$0xff]
    %v1353 = vld [vmem:[#allocation6 + $0x1d0] sm:$0xff]
    %v1354 = vld [vmem:[#allocation6 + $0x1d8] sm:$0xff]
    %v1355 = vld [vmem:[#allocation6 + $0x1e0] sm:$0xff]
    %v1356 = vld [vmem:[#allocation6 + $0x1e8] sm:$0xff]
    %v1357 = vld [vmem:[#allocation6 + $0x1f0] sm:$0xff]
    %v1358 = vld [vmem:[#allocation6 + $0x1f8] sm:$0xff]
    %v1359 = vld [vmem:[#allocation6 + $0x200] sm:$0xff]
    %v1360 = vld [vmem:[#allocation6 + $0x208] sm:$0xff]
    %v1361 = vld [vmem:[#allocation6 + $0x210] sm:$0xff]
    %v1362 = vld [vmem:[#allocation6 + $0x218] sm:$0xff]
    %v1363 = vld [vmem:[#allocation6 + $0x220] sm:$0xff]
    %v1364 = vld [vmem:[#allocation6 + $0x228] sm:$0xff]
    %v1365 = vld [vmem:[#allocation6 + $0x230] sm:$0xff]
    %v1366 = vld [vmem:[#allocation6 + $0x238] sm:$0xff]
    %v1367 = vld [vmem:[#allocation6 + $0x240] sm:$0xff]
    %v1368 = vld [vmem:[#allocation6 + $0x248] sm:$0xff]
    %v1369 = vld [vmem:[#allocation6 + $0x250] sm:$0xff]
    %v1370 = vld [vmem:[#allocation6 + $0x258] sm:$0xff]
    %v1371 = vld [vmem:[#allocation6 + $0x260] sm:$0xff]
    %v1372 = vld [vmem:[#allocation6 + $0x268] sm:$0xff]
    %v1373 = vld [vmem:[#allocation6 + $0x270] sm:$0xff]
    %v1374 = vld [vmem:[#allocation6 + $0x278] sm:$0xff]
    %v1375 = vld [vmem:[#allocation6 + $0x280] sm:$0xff]
    %v1376 = vld [vmem:[#allocation6 + $0x288] sm:$0xff]
    %v1377 = vld [vmem:[#allocation6 + $0x290] sm:$0xff]
    %v1378 = vld [vmem:[#allocation6 + $0x298] sm:$0xff]
    %v1379 = vld [vmem:[#allocation6 + $0x2a0] sm:$0xff]
    %v1380 = vld [vmem:[#allocation6 + $0x2a8] sm:$0xff]
    %v1381 = vld [vmem:[#allocation6 + $0x2b0] sm:$0xff]
    %v1382 = vld [vmem:[#allocation6 + $0x2b8] sm:$0xff]
    %v1383 = vld [vmem:[#allocation6 + $0x2c0] sm:$0xff]
    %v1384 = vld [vmem:[#allocation6 + $0x2c8] sm:$0xff]
    %v1385 = vld [vmem:[#allocation6 + $0x2d0] sm:$0xff]
    %v1386 = vld [vmem:[#allocation6 + $0x2d8] sm:$0xff]
    %v1387 = vld [vmem:[#allocation6 + $0x2e0] sm:$0xff]
    %v1388 = vld [vmem:[#allocation6 + $0x2e8] sm:$0xff]
    %v1389 = vld [vmem:[#allocation6 + $0x2f0] sm:$0xff]
    %v1390 = vld [vmem:[#allocation6 + $0x2f8] sm:$0xff]
    %v1391 = vld [vmem:[#allocation6 + $0x300] sm:$0xff]
    %v1392 = vld [vmem:[#allocation6 + $0x308] sm:$0xff]
    %v1393 = vld [vmem:[#allocation6 + $0x310] sm:$0xff]
    %v1394 = vld [vmem:[#allocation6 + $0x318] sm:$0xff]
    %v1395 = vld [vmem:[#allocation6 + $0x320] sm:$0xff]
    %v1396 = vld [vmem:[#allocation6 + $0x328] sm:$0xff]
    %v1397 = vld [vmem:[#allocation6 + $0x330] sm:$0xff]
    %v1398 = vld [vmem:[#allocation6 + $0x338] sm:$0xff]
    %v1399 = vld [vmem:[#allocation6 + $0x340] sm:$0xff]
    %v1400 = vld [vmem:[#allocation6 + $0x348] sm:$0xff]
    %v1401 = vld [vmem:[#allocation6 + $0x350] sm:$0xff]
    %v1402 = vld [vmem:[#allocation6 + $0x358] sm:$0xff]
    %v1403 = vld [vmem:[#allocation6 + $0x360] sm:$0xff]
    %v1404 = vld [vmem:[#allocation6 + $0x368] sm:$0xff]
    %v1405 = vld [vmem:[#allocation6 + $0x370] sm:$0xff]
    %v1406 = vld [vmem:[#allocation6 + $0x378] sm:$0xff]
    %v1407 = vld [vmem:[#allocation6 + $0x380] sm:$0xff]
    %v1408 = vld [vmem:[#allocation6 + $0x388] sm:$0xff]
    %v1409 = vld [vmem:[#allocation6 + $0x390] sm:$0xff]
    %v1410 = vld [vmem:[#allocation6 + $0x398] sm:$0xff]
    %v1411 = vld [vmem:[#allocation6 + $0x3a0] sm:$0xff]
    %v1412 = vld [vmem:[#allocation6 + $0x3a8] sm:$0xff]
    %v1413 = vld [vmem:[#allocation6 + $0x3b0] sm:$0xff]
    %v1414 = vld [vmem:[#allocation6 + $0x3b8] sm:$0xff]
    %v1415 = vld [vmem:[#allocation6 + $0x3c0] sm:$0xff]
    %v1416 = vld [vmem:[#allocation6 + $0x3c8] sm:$0xff]
    %v1417 = vld [vmem:[#allocation6 + $0x3d0] sm:$0xff]
    %v1418 = vld [vmem:[#allocation6 + $0x3d8] sm:$0xff]
    %v1419 = vld [vmem:[#allocation6 + $0x3e0] sm:$0xff]
    %v1420 = vld [vmem:[#allocation6 + $0x3e8] sm:$0xff]
    %v1421 = vld [vmem:[#allocation6 + $0x3f0] sm:$0xff]
    %v1422 = vld [vmem:[#allocation6 + $0x3f8] sm:$0xff]
    %v1423 = vld [vmem:[#allocation7] sm:$0x3]
    %v1425 = vlaneseq
    %v1426 = vshrl.u32 %v1425, 7
    %v1427 = vsub.s32 0, %v1426
    %v1428 = vrot.slane %v1423, %v1427
    %v1429 = vlaneseq
    %v1430 = vshrl.u32 %v1429, 7
    %v1431 = vsub.s32 1, %v1430
    %v1432 = vrot.slane %v1423, %v1431
    %1435 = vmatprep.subr.mxu0 %v1296
    %1436 = vmatpush1.msra.mxu0 %v1295
    %1437 = vmatprep.subr.mxu0 %v1298
    %1438 = vmatpush1.msra.mxu0 %v1297
    %1439 = vmatprep.subr.mxu0 %v1300
    %1440 = vmatpush1.msra.mxu0 %v1299
    %1441 = vmatprep.subr.mxu0 %v1302
    %1442 = vmatpush1.msra.mxu0 %v1301
    %1443 = vmatprep.subr.mxu0 %v1304
    %1444 = vmatpush1.msra.mxu0 %v1303
    %1445 = vmatprep.subr.mxu0 %v1306
    %1446 = vmatpush1.msra.mxu0 %v1305
    %1447 = vmatprep.subr.mxu0 %v1308
    %1448 = vmatpush1.msra.mxu0 %v1307
    %1449 = vmatprep.subr.mxu0 %v1310
    %1450 = vmatpush1.msra.mxu0 %v1309
    %1451 = vmatprep.subr.mxu0 %v1312
    %1452 = vmatpush1.msra.mxu0 %v1311
    %1453 = vmatprep.subr.mxu0 %v1314
    %1454 = vmatpush1.msra.mxu0 %v1313
    %1455 = vmatprep.subr.mxu0 %v1316
    %1456 = vmatpush1.msra.mxu0 %v1315
    %1457 = vmatprep.subr.mxu0 %v1318
    %1458 = vmatpush1.msra.mxu0 %v1317
    %1459 = vmatprep.subr.mxu0 %v1320
    %1460 = vmatpush1.msra.mxu0 %v1319
    %1461 = vmatprep.subr.mxu0 %v1322
    %1462 = vmatpush1.msra.mxu0 %v1321
    %1463 = vmatprep.subr.mxu0 %v1324
    %1464 = vmatpush1.msra.mxu0 %v1323
    %1465 = vmatprep.subr.mxu0 %v1326
    %1466 = vmatpush1.msra.mxu0 %v1325
    %1467 = vmatprep.subr.mxu0 %v1328
    %1468 = vmatpush1.msra.mxu0 %v1327
    %1469 = vmatprep.subr.mxu0 %v1330
    %1470 = vmatpush1.msra.mxu0 %v1329
    %1471 = vmatprep.subr.mxu0 %v1332
    %1472 = vmatpush1.msra.mxu0 %v1331
    %1473 = vmatprep.subr.mxu0 %v1334
    %1474 = vmatpush1.msra.mxu0 %v1333
    %1475 = vmatprep.subr.mxu0 %v1336
    %1476 = vmatpush1.msra.mxu0 %v1335
    %1477 = vmatprep.subr.mxu0 %v1338
    %1478 = vmatpush1.msra.mxu0 %v1337
    %1479 = vmatprep.subr.mxu0 %v1340
    %1480 = vmatpush1.msra.mxu0 %v1339
    %1481 = vmatprep.subr.mxu0 %v1342
    %1482 = vmatpush1.msra.mxu0 %v1341
    %1483 = vmatprep.subr.mxu0 %v1344
    %1484 = vmatpush1.msra.mxu0 %v1343
    %1485 = vmatprep.subr.mxu0 %v1346
    %1486 = vmatpush1.msra.mxu0 %v1345
    %1487 = vmatprep.subr.mxu0 %v1348
    %1488 = vmatpush1.msra.mxu0 %v1347
    %1489 = vmatprep.subr.mxu0 %v1350
    %1490 = vmatpush1.msra.mxu0 %v1349
    %1491 = vmatprep.subr.mxu0 %v1352
    %1492 = vmatpush1.msra.mxu0 %v1351
    %1493 = vmatprep.subr.mxu0 %v1354
    %1494 = vmatpush1.msra.mxu0 %v1353
    %1495 = vmatprep.subr.mxu0 %v1356
    %1496 = vmatpush1.msra.mxu0 %v1355
    %1497 = vmatprep.subr.mxu0 %v1358
    %1498 = vmatpush1.msra.mxu0 %v1357
    %1499 = vmatprep.mubr.f32.mxu0 %v1292
    %1500 = vmatmul.mubr.f32.gmra.mrb[0].mxu0 %v1291
    %v1501 = vpop.f32.mrb[0].mxu0
    %v1502 = vadd.f32 %v1428, %v1501
    %v1503 = vpop.f32.mrb[0].mxu0
    %v1504 = vadd.f32 %v1432, %v1503
    %1505 = vdwg.mxu0
    %1506 = vmatprep.subr.mxu0 %v1360
    %1507 = vmatpush1.msra.mxu0 %v1359
    %1508 = vmatprep.subr.mxu0 %v1362
    %1509 = vmatpush1.msra.mxu0 %v1361
    %1510 = vmatprep.subr.mxu0 %v1364
    %1511 = vmatpush1.msra.mxu0 %v1363
    %1512 = vmatprep.subr.mxu0 %v1366
    %1513 = vmatpush1.msra.mxu0 %v1365
    %1514 = vmatprep.subr.mxu0 %v1368
    %1515 = vmatpush1.msra.mxu0 %v1367
    %1516 = vmatprep.subr.mxu0 %v1370
    %1517 = vmatpush1.msra.mxu0 %v1369
    %1518 = vmatprep.subr.mxu0 %v1372
    %1519 = vmatpush1.msra.mxu0 %v1371
    %1520 = vmatprep.subr.mxu0 %v1374
    %1521 = vmatpush1.msra.mxu0 %v1373
    %1522 = vmatprep.subr.mxu0 %v1376
    %1523 = vmatpush1.msra.mxu0 %v1375
    %1524 = vmatprep.subr.mxu0 %v1378
    %1525 = vmatpush1.msra.mxu0 %v1377
    %1526 = vmatprep.subr.mxu0 %v1380
    %1527 = vmatpush1.msra.mxu0 %v1379
    %1528 = vmatprep.subr.mxu0 %v1382
    %1529 = vmatpush1.msra.mxu0 %v1381
    %1530 = vmatprep.subr.mxu0 %v1384
    %1531 = vmatpush1.msra.mxu0 %v1383
    %1532 = vmatprep.subr.mxu0 %v1386
    %1533 = vmatpush1.msra.mxu0 %v1385
    %1534 = vmatprep.subr.mxu0 %v1388
    %1535 = vmatpush1.msra.mxu0 %v1387
    %1536 = vmatprep.subr.mxu0 %v1390
    %1537 = vmatpush1.msra.mxu0 %v1389
    %1538 = vmatprep.subr.mxu0 %v1392
    %1539 = vmatpush1.msra.mxu0 %v1391
    %1540 = vmatprep.subr.mxu0 %v1394
    %1541 = vmatpush1.msra.mxu0 %v1393
    %1542 = vmatprep.subr.mxu0 %v1396
    %1543 = vmatpush1.msra.mxu0 %v1395
    %1544 = vmatprep.subr.mxu0 %v1398
    %1545 = vmatpush1.msra.mxu0 %v1397
    %1546 = vmatprep.subr.mxu0 %v1400
    %1547 = vmatpush1.msra.mxu0 %v1399
    %1548 = vmatprep.subr.mxu0 %v1402
    %1549 = vmatpush1.msra.mxu0 %v1401
    %1550 = vmatprep.subr.mxu0 %v1404
    %1551 = vmatpush1.msra.mxu0 %v1403
    %1552 = vmatprep.subr.mxu0 %v1406
    %1553 = vmatpush1.msra.mxu0 %v1405
    %1554 = vmatprep.subr.mxu0 %v1408
    %1555 = vmatpush1.msra.mxu0 %v1407
    %1556 = vmatprep.subr.mxu0 %v1410
    %1557 = vmatpush1.msra.mxu0 %v1409
    %1558 = vmatprep.subr.mxu0 %v1412
    %1559 = vmatpush1.msra.mxu0 %v1411
    %1560 = vmatprep.subr.mxu0 %v1414
    %1561 = vmatpush1.msra.mxu0 %v1413
    %1562 = vmatprep.subr.mxu0 %v1416
    %1563 = vmatpush1.msra.mxu0 %v1415
    %1564 = vmatprep.subr.mxu0 %v1418
    %1565 = vmatpush1.msra.mxu0 %v1417
    %1566 = vmatprep.subr.mxu0 %v1420
    %1567 = vmatpush1.msra.mxu0 %v1419
    %1568 = vmatprep.subr.mxu0 %v1422
    %1569 = vmatpush1.msra.mxu0 %v1421
    %1570 = vmatprep.mubr.f32.mxu0 %v1294
    %1571 = vmatmul.mubr.f32.gmra.mrb[0].mxu0 %v1293
    %v1572 = vpop.f32.mrb[0].mxu0
    %v1573 = vadd.f32 %v1502, %v1572
    %v1574 = vpop.f32.mrb[0].mxu0
    %v1575 = vadd.f32 %v1504, %v1574
    %1576 = vdwg.mxu0
    %v1577 = vmax.f32 %v1573, 0.0
    %v1578 = vmax.f32 %v1575, 0.0
    %v1579 = vld [vmem:[#allocation9] sm:$0xff]
    %v1580 = vld [vmem:[#allocation9 + $0x8] sm:$0xff]
    %v1581 = vld [vmem:[#allocation9 + $0x10] sm:$0xff]
    %v1582 = vld [vmem:[#allocation9 + $0x18] sm:$0xff]
    %v1583 = vld [vmem:[#allocation9 + $0x20] sm:$0xff]
    %v1584 = vld [vmem:[#allocation9 + $0x28] sm:$0xff]
    %v1585 = vld [vmem:[#allocation9 + $0x30] sm:$0xff]
    %v1586 = vld [vmem:[#allocation9 + $0x38] sm:$0xff]
    %v1587 = vld [vmem:[#allocation9 + $0x40] sm:$0xff]
    %v1588 = vld [vmem:[#allocation9 + $0x48] sm:$0xff]
    %v1589 = vld [vmem:[#allocation9 + $0x50] sm:$0xff]
    %v1590 = vld [vmem:[#allocation9 + $0x58] sm:$0xff]
    %v1591 = vld [vmem:[#allocation9 + $0x60] sm:$0xff]
    %v1592 = vld [vmem:[#allocation9 + $0x68] sm:$0xff]
    %v1593 = vld [vmem:[#allocation9 + $0x70] sm:$0xff]
    %v1594 = vld [vmem:[#allocation9 + $0x78] sm:$0xff]
    %v1595 = vld [vmem:[#allocation9 + $0x80] sm:$0xff]
    %v1596 = vld [vmem:[#allocation9 + $0x88] sm:$0xff]
    %v1597 = vld [vmem:[#allocation9 + $0x90] sm:$0xff]
    %v1598 = vld [vmem:[#allocation9 + $0x98] sm:$0xff]
    %v1599 = vld [vmem:[#allocation9 + $0xa0] sm:$0xff]
    %v1600 = vld [vmem:[#allocation9 + $0xa8] sm:$0xff]
    %v1601 = vld [vmem:[#allocation9 + $0xb0] sm:$0xff]
    %v1602 = vld [vmem:[#allocation9 + $0xb8] sm:$0xff]
    %v1603 = vld [vmem:[#allocation9 + $0xc0] sm:$0xff]
    %v1604 = vld [vmem:[#allocation9 + $0xc8] sm:$0xff]
    %v1605 = vld [vmem:[#allocation9 + $0xd0] sm:$0xff]
    %v1606 = vld [vmem:[#allocation9 + $0xd8] sm:$0xff]
    %v1607 = vld [vmem:[#allocation9 + $0xe0] sm:$0xff]
    %v1608 = vld [vmem:[#allocation9 + $0xe8] sm:$0xff]
    %v1609 = vld [vmem:[#allocation9 + $0xf0] sm:$0xff]
    %v1610 = vld [vmem:[#allocation9 + $0xf8] sm:$0xff]
    %v1611 = vld [vmem:[#allocation9 + $0x100] sm:$0xff]
    %v1612 = vld [vmem:[#allocation9 + $0x108] sm:$0xff]
    %v1613 = vld [vmem:[#allocation9 + $0x110] sm:$0xff]
    %v1614 = vld [vmem:[#allocation9 + $0x118] sm:$0xff]
    %v1615 = vld [vmem:[#allocation9 + $0x120] sm:$0xff]
    %v1616 = vld [vmem:[#allocation9 + $0x128] sm:$0xff]
    %v1617 = vld [vmem:[#allocation9 + $0x130] sm:$0xff]
    %v1618 = vld [vmem:[#allocation9 + $0x138] sm:$0xff]
    %v1619 = vld [vmem:[#allocation9 + $0x140] sm:$0xff]
    %v1620 = vld [vmem:[#allocation9 + $0x148] sm:$0xff]
    %v1621 = vld [vmem:[#allocation9 + $0x150] sm:$0xff]
    %v1622 = vld [vmem:[#allocation9 + $0x158] sm:$0xff]
    %v1623 = vld [vmem:[#allocation9 + $0x160] sm:$0xff]
    %v1624 = vld [vmem:[#allocation9 + $0x168] sm:$0xff]
    %v1625 = vld [vmem:[#allocation9 + $0x170] sm:$0xff]
    %v1626 = vld [vmem:[#allocation9 + $0x178] sm:$0xff]
    %v1627 = vld [vmem:[#allocation9 + $0x180] sm:$0xff]
    %v1628 = vld [vmem:[#allocation9 + $0x188] sm:$0xff]
    %v1629 = vld [vmem:[#allocation9 + $0x190] sm:$0xff]
    %v1630 = vld [vmem:[#allocation9 + $0x198] sm:$0xff]
    %v1631 = vld [vmem:[#allocation9 + $0x1a0] sm:$0xff]
    %v1632 = vld [vmem:[#allocation9 + $0x1a8] sm:$0xff]
    %v1633 = vld [vmem:[#allocation9 + $0x1b0] sm:$0xff]
    %v1634 = vld [vmem:[#allocation9 + $0x1b8] sm:$0xff]
    %v1635 = vld [vmem:[#allocation9 + $0x1c0] sm:$0xff]
    %v1636 = vld [vmem:[#allocation9 + $0x1c8] sm:$0xff]
    %v1637 = vld [vmem:[#allocation9 + $0x1d0] sm:$0xff]
    %v1638 = vld [vmem:[#allocation9 + $0x1d8] sm:$0xff]
    %v1639 = vld [vmem:[#allocation9 + $0x1e0] sm:$0xff]
    %v1640 = vld [vmem:[#allocation9 + $0x1e8] sm:$0xff]
    %v1641 = vld [vmem:[#allocation9 + $0x1f0] sm:$0xff]
    %v1642 = vld [vmem:[#allocation9 + $0x1f8] sm:$0xff]
    %v1643 = vld [vmem:[#allocation9 + $0x200] sm:$0xff]
    %v1644 = vld [vmem:[#allocation9 + $0x208] sm:$0xff]
    %v1645 = vld [vmem:[#allocation9 + $0x210] sm:$0xff]
    %v1646 = vld [vmem:[#allocation9 + $0x218] sm:$0xff]
    %v1647 = vld [vmem:[#allocation9 + $0x220] sm:$0xff]
    %v1648 = vld [vmem:[#allocation9 + $0x228] sm:$0xff]
    %v1649 = vld [vmem:[#allocation9 + $0x230] sm:$0xff]
    %v1650 = vld [vmem:[#allocation9 + $0x238] sm:$0xff]
    %v1651 = vld [vmem:[#allocation9 + $0x240] sm:$0xff]
    %v1652 = vld [vmem:[#allocation9 + $0x248] sm:$0xff]
    %v1653 = vld [vmem:[#allocation9 + $0x250] sm:$0xff]
    %v1654 = vld [vmem:[#allocation9 + $0x258] sm:$0xff]
    %v1655 = vld [vmem:[#allocation9 + $0x260] sm:$0xff]
    %v1656 = vld [vmem:[#allocation9 + $0x268] sm:$0xff]
    %v1657 = vld [vmem:[#allocation9 + $0x270] sm:$0xff]
    %v1658 = vld [vmem:[#allocation9 + $0x278] sm:$0xff]
    %v1659 = vld [vmem:[#allocation9 + $0x280] sm:$0xff]
    %v1660 = vld [vmem:[#allocation9 + $0x288] sm:$0xff]
    %v1661 = vld [vmem:[#allocation9 + $0x290] sm:$0xff]
    %v1662 = vld [vmem:[#allocation9 + $0x298] sm:$0xff]
    %v1663 = vld [vmem:[#allocation9 + $0x2a0] sm:$0xff]
    %v1664 = vld [vmem:[#allocation9 + $0x2a8] sm:$0xff]
    %v1665 = vld [vmem:[#allocation9 + $0x2b0] sm:$0xff]
    %v1666 = vld [vmem:[#allocation9 + $0x2b8] sm:$0xff]
    %v1667 = vld [vmem:[#allocation9 + $0x2c0] sm:$0xff]
    %v1668 = vld [vmem:[#allocation9 + $0x2c8] sm:$0xff]
    %v1669 = vld [vmem:[#allocation9 + $0x2d0] sm:$0xff]
    %v1670 = vld [vmem:[#allocation9 + $0x2d8] sm:$0xff]
    %v1671 = vld [vmem:[#allocation9 + $0x2e0] sm:$0xff]
    %v1672 = vld [vmem:[#allocation9 + $0x2e8] sm:$0xff]
    %v1673 = vld [vmem:[#allocation9 + $0x2f0] sm:$0xff]
    %v1674 = vld [vmem:[#allocation9 + $0x2f8] sm:$0xff]
    %v1675 = vld [vmem:[#allocation9 + $0x300] sm:$0xff]
    %v1676 = vld [vmem:[#allocation9 + $0x308] sm:$0xff]
    %v1677 = vld [vmem:[#allocation9 + $0x310] sm:$0xff]
    %v1678 = vld [vmem:[#allocation9 + $0x318] sm:$0xff]
    %v1679 = vld [vmem:[#allocation9 + $0x320] sm:$0xff]
    %v1680 = vld [vmem:[#allocation9 + $0x328] sm:$0xff]
    %v1681 = vld [vmem:[#allocation9 + $0x330] sm:$0xff]
    %v1682 = vld [vmem:[#allocation9 + $0x338] sm:$0xff]
    %v1683 = vld [vmem:[#allocation9 + $0x340] sm:$0xff]
    %v1684 = vld [vmem:[#allocation9 + $0x348] sm:$0xff]
    %v1685 = vld [vmem:[#allocation9 + $0x350] sm:$0xff]
    %v1686 = vld [vmem:[#allocation9 + $0x358] sm:$0xff]
    %v1687 = vld [vmem:[#allocation9 + $0x360] sm:$0xff]
    %v1688 = vld [vmem:[#allocation9 + $0x368] sm:$0xff]
    %v1689 = vld [vmem:[#allocation9 + $0x370] sm:$0xff]
    %v1690 = vld [vmem:[#allocation9 + $0x378] sm:$0xff]
    %v1691 = vld [vmem:[#allocation9 + $0x380] sm:$0xff]
    %v1692 = vld [vmem:[#allocation9 + $0x388] sm:$0xff]
    %v1693 = vld [vmem:[#allocation9 + $0x390] sm:$0xff]
    %v1694 = vld [vmem:[#allocation9 + $0x398] sm:$0xff]
    %v1695 = vld [vmem:[#allocation9 + $0x3a0] sm:$0xff]
    %v1696 = vld [vmem:[#allocation9 + $0x3a8] sm:$0xff]
    %v1697 = vld [vmem:[#allocation9 + $0x3b0] sm:$0xff]
    %v1698 = vld [vmem:[#allocation9 + $0x3b8] sm:$0xff]
    %v1699 = vld [vmem:[#allocation9 + $0x3c0] sm:$0xff]
    %v1700 = vld [vmem:[#allocation9 + $0x3c8] sm:$0xff]
    %v1701 = vld [vmem:[#allocation9 + $0x3d0] sm:$0xff]
    %v1702 = vld [vmem:[#allocation9 + $0x3d8] sm:$0xff]
    %v1703 = vld [vmem:[#allocation9 + $0x3e0] sm:$0xff]
    %v1704 = vld [vmem:[#allocation9 + $0x3e8] sm:$0xff]
    %v1705 = vld [vmem:[#allocation9 + $0x3f0] sm:$0xff]
    %v1706 = vld [vmem:[#allocation9 + $0x3f8] sm:$0xff]
    %v1707 = vld [vmem:[%s1] sm:$0xff]
    %v1708 = vld [vmem:[#allocation10] sm:$0xff]
    %v1709 = vld [vmem:[#allocation10 + $0x8] sm:$0xff]
    %v1712 = vcombine.high %v1708, %v1708
    %v1713 = vcombine.high %v1709, %v1709
    %vm1714 = vcmask 31744
    %v1716 = vsel %vm1714, %v1707, 0
    %vm1718 = vcmask 1043456
    %v1719 = vsel %vm1718, %v1708, 0
    %v1721 = vsel %vm1718, %v1712, 0
    %v1723 = vsel %vm1718, %v1709, 0
    %v1725 = vsel %vm1718, %v1713, 0
    %1727 = vmatprep.subr.mxu0 %v1721
    %1728 = vmatpush1.msra.mxu0 %v1719
    %1729 = vmatprep.subr.mxu0 0.0
    %1730 = vmatpush1.msra.mxu0 0.0
    %1731 = vmatprep.subr.mxu0 0.0
    %1732 = vmatpush1.msra.mxu0 0.0
    %1733 = vmatprep.subr.mxu0 0.0
    %1734 = vmatpush1.msra.mxu0 0.0
    %1735 = vmatprep.subr.mxu0 0.0
    %1736 = vmatpush1.msra.mxu0 0.0
    %1737 = vmatprep.subr.mxu0 0.0
    %1738 = vmatpush1.msra.mxu0 0.0
    %1739 = vmatprep.subr.mxu0 0.0
    %1740 = vmatpush1.msra.mxu0 0.0
    %1741 = vmatprep.subr.mxu0 0.0
    %1742 = vmatpush1.msra.mxu0 0.0
    %1743 = vmatprep.subr.mxu0 0.0
    %1744 = vmatpush1.msra.mxu0 0.0
    %1745 = vmatprep.subr.mxu0 0.0
    %1746 = vmatpush1.msra.mxu0 0.0
    %1747 = vmatprep.subr.mxu0 0.0
    %1748 = vmatpush1.msra.mxu0 0.0
    %1749 = vmatprep.subr.mxu0 0.0
    %1750 = vmatpush1.msra.mxu0 0.0
    %1751 = vmatprep.subr.mxu0 0.0
    %1752 = vmatpush1.msra.mxu0 0.0
    %1753 = vmatprep.subr.mxu0 0.0
    %1754 = vmatpush1.msra.mxu0 0.0
    %1755 = vmatprep.subr.mxu0 0.0
    %1756 = vmatpush1.msra.mxu0 0.0
    %1757 = vmatprep.subr.mxu0 0.0
    %1758 = vmatpush1.msra.mxu0 0.0
    %1759 = vmatprep.subr.mxu0 0.0
    %1760 = vmatpush1.msra.mxu0 0.0
    %1761 = vmatprep.subr.mxu0 0.0
    %1762 = vmatpush1.msra.mxu0 0.0
    %1763 = vmatprep.subr.mxu0 0.0
    %1764 = vmatpush1.msra.mxu0 0.0
    %1765 = vmatprep.subr.mxu0 0.0
    %1766 = vmatpush1.msra.mxu0 0.0
    %1767 = vmatprep.subr.mxu0 0.0
    %1768 = vmatpush1.msra.mxu0 0.0
    %1769 = vmatprep.subr.mxu0 0.0
    %1770 = vmatpush1.msra.mxu0 0.0
    %1771 = vmatprep.subr.mxu0 0.0
    %1772 = vmatpush1.msra.mxu0 0.0
    %1773 = vmatprep.subr.mxu0 0.0
    %1774 = vmatpush1.msra.mxu0 0.0
    %1775 = vmatprep.subr.mxu0 0.0
    %1776 = vmatpush1.msra.mxu0 0.0
    %1777 = vmatprep.subr.mxu0 0.0
    %1778 = vmatpush1.msra.mxu0 0.0
    %1779 = vmatprep.subr.mxu0 0.0
    %1780 = vmatpush1.msra.mxu0 0.0
    %1781 = vmatprep.subr.mxu0 0.0
    %1782 = vmatpush1.msra.mxu0 0.0
    %1783 = vmatprep.subr.mxu0 0.0
    %1784 = vmatpush1.msra.mxu0 0.0
    %1785 = vmatprep.subr.mxu0 0.0
    %1786 = vmatpush1.msra.mxu0 0.0
    %1787 = vmatprep.subr.mxu0 0.0
    %1788 = vmatpush1.msra.mxu0 0.0
    %1789 = vmatprep.subr.mxu0 0.0
    %1790 = vmatpush1.msra.mxu0 0.0
    %1791 = vmatprep.mubr.f32.mxu0 0.0
    %1792 = vmatmul.mubr.f32.gmra.mrb[0].mxu0 %v1716
    %v1793 = vpop.f32.mrb[0].mxu0
    %v1794 = vadd.f32 0.0, %v1793
    %v1795 = vpop.f32.mrb[0].mxu0
    %v1796 = vadd.f32 0.0, %v1795
    %1797 = vdwg.mxu0
    %1798 = vmatprep.subr.mxu0 %v1725
    %1799 = vmatpush1.msra.mxu0 %v1723
    %1800 = vmatprep.subr.mxu0 0.0
    %1801 = vmatpush1.msra.mxu0 0.0
    %1802 = vmatprep.subr.mxu0 0.0
    %1803 = vmatpush1.msra.mxu0 0.0
    %1804 = vmatprep.subr.mxu0 0.0
    %1805 = vmatpush1.msra.mxu0 0.0
    %1806 = vmatprep.subr.mxu0 0.0
    %1807 = vmatpush1.msra.mxu0 0.0
    %1808 = vmatprep.subr.mxu0 0.0
    %1809 = vmatpush1.msra.mxu0 0.0
    %1810 = vmatprep.subr.mxu0 0.0
    %1811 = vmatpush1.msra.mxu0 0.0
    %1812 = vmatprep.subr.mxu0 0.0
    %1813 = vmatpush1.msra.mxu0 0.0
    %1814 = vmatprep.subr.mxu0 0.0
    %1815 = vmatpush1.msra.mxu0 0.0
    %1816 = vmatprep.subr.mxu0 0.0
    %1817 = vmatpush1.msra.mxu0 0.0
    %1818 = vmatprep.subr.mxu0 0.0
    %1819 = vmatpush1.msra.mxu0 0.0
    %1820 = vmatprep.subr.mxu0 0.0
    %1821 = vmatpush1.msra.mxu0 0.0
    %1822 = vmatprep.subr.mxu0 0.0
    %1823 = vmatpush1.msra.mxu0 0.0
    %1824 = vmatprep.subr.mxu0 0.0
    %1825 = vmatpush1.msra.mxu0 0.0
    %1826 = vmatprep.subr.mxu0 0.0
    %1827 = vmatpush1.msra.mxu0 0.0
    %1828 = vmatprep.subr.mxu0 0.0
    %1829 = vmatpush1.msra.mxu0 0.0
    %1830 = vmatprep.subr.mxu0 0.0
    %1831 = vmatpush1.msra.mxu0 0.0
    %1832 = vmatprep.subr.mxu0 0.0
    %1833 = vmatpush1.msra.mxu0 0.0
    %1834 = vmatprep.subr.mxu0 0.0
    %1835 = vmatpush1.msra.mxu0 0.0
    %1836 = vmatprep.subr.mxu0 0.0
    %1837 = vmatpush1.msra.mxu0 0.0
    %1838 = vmatprep.subr.mxu0 0.0
    %1839 = vmatpush1.msra.mxu0 0.0
    %1840 = vmatprep.subr.mxu0 0.0
    %1841 = vmatpush1.msra.mxu0 0.0
    %1842 = vmatprep.subr.mxu0 0.0
    %1843 = vmatpush1.msra.mxu0 0.0
    %1844 = vmatprep.subr.mxu0 0.0
    %1845 = vmatpush1.msra.mxu0 0.0
    %1846 = vmatprep.subr.mxu0 0.0
    %1847 = vmatpush1.msra.mxu0 0.0
    %1848 = vmatprep.subr.mxu0 0.0
    %1849 = vmatpush1.msra.mxu0 0.0
    %1850 = vmatprep.subr.mxu0 0.0
    %1851 = vmatpush1.msra.mxu0 0.0
    %1852 = vmatprep.subr.mxu0 0.0
    %1853 = vmatpush1.msra.mxu0 0.0
    %1854 = vmatprep.subr.mxu0 0.0
    %1855 = vmatpush1.msra.mxu0 0.0
    %1856 = vmatprep.subr.mxu0 0.0
    %1857 = vmatpush1.msra.mxu0 0.0
    %1858 = vmatprep.subr.mxu0 0.0
    %1859 = vmatpush1.msra.mxu0 0.0
    %1860 = vmatprep.subr.mxu0 0.0
    %1861 = vmatpush1.msra.mxu0 0.0
    %1862 = vmatprep.mubr.f32.mxu0 0.0
    %1863 = vmatmul.mubr.f32.gmra.mrb[0].mxu0 %v1716
    %v1864 = vpop.f32.mrb[0].mxu0
    %v1865 = vadd.f32 0.0, %v1864
    %v1866 = vpop.f32.mrb[0].mxu0
    %v1867 = vadd.f32 0.0, %v1866
    %1868 = vdwg.mxu0
    %1869 = vmatprep.subr.mxu0 %v1580
    %1870 = vmatpush1.msra.mxu0 %v1579
    %1871 = vmatprep.subr.mxu0 %v1584
    %1872 = vmatpush1.msra.mxu0 %v1583
    %1873 = vmatprep.subr.mxu0 %v1588
    %1874 = vmatpush1.msra.mxu0 %v1587
    %1875 = vmatprep.subr.mxu0 %v1592
    %1876 = vmatpush1.msra.mxu0 %v1591
    %1877 = vmatprep.subr.mxu0 %v1596
    %1878 = vmatpush1.msra.mxu0 %v1595
    %1879 = vmatprep.subr.mxu0 %v1600
    %1880 = vmatpush1.msra.mxu0 %v1599
    %1881 = vmatprep.subr.mxu0 %v1604
    %1882 = vmatpush1.msra.mxu0 %v1603
    %1883 = vmatprep.subr.mxu0 %v1608
    %1884 = vmatpush1.msra.mxu0 %v1607
    %1885 = vmatprep.subr.mxu0 %v1612
    %1886 = vmatpush1.msra.mxu0 %v1611
    %1887 = vmatprep.subr.mxu0 %v1616
    %1888 = vmatpush1.msra.mxu0 %v1615
    %1889 = vmatprep.subr.mxu0 %v1620
    %1890 = vmatpush1.msra.mxu0 %v1619
    %1891 = vmatprep.subr.mxu0 %v1624
    %1892 = vmatpush1.msra.mxu0 %v1623
    %1893 = vmatprep.subr.mxu0 %v1628
    %1894 = vmatpush1.msra.mxu0 %v1627
    %1895 = vmatprep.subr.mxu0 %v1632
    %1896 = vmatpush1.msra.mxu0 %v1631
    %1897 = vmatprep.subr.mxu0 %v1636
    %1898 = vmatpush1.msra.mxu0 %v1635
    %1899 = vmatprep.subr.mxu0 %v1640
    %1900 = vmatpush1.msra.mxu0 %v1639
    %1901 = vmatprep.subr.mxu0 %v1644
    %1902 = vmatpush1.msra.mxu0 %v1643
    %1903 = vmatprep.subr.mxu0 %v1648
    %1904 = vmatpush1.msra.mxu0 %v1647
    %1905 = vmatprep.subr.mxu0 %v1652
    %1906 = vmatpush1.msra.mxu0 %v1651
    %1907 = vmatprep.subr.mxu0 %v1656
    %1908 = vmatpush1.msra.mxu0 %v1655
    %1909 = vmatprep.subr.mxu0 %v1660
    %1910 = vmatpush1.msra.mxu0 %v1659
    %1911 = vmatprep.subr.mxu0 %v1664
    %1912 = vmatpush1.msra.mxu0 %v1663
    %1913 = vmatprep.subr.mxu0 %v1668
    %1914 = vmatpush1.msra.mxu0 %v1667
    %1915 = vmatprep.subr.mxu0 %v1672
    %1916 = vmatpush1.msra.mxu0 %v1671
    %1917 = vmatprep.subr.mxu0 %v1676
    %1918 = vmatpush1.msra.mxu0 %v1675
    %1919 = vmatprep.subr.mxu0 %v1680
    %1920 = vmatpush1.msra.mxu0 %v1679
    %1921 = vmatprep.subr.mxu0 %v1684
    %1922 = vmatpush1.msra.mxu0 %v1683
    %1923 = vmatprep.subr.mxu0 %v1688
    %1924 = vmatpush1.msra.mxu0 %v1687
    %1925 = vmatprep.subr.mxu0 %v1692
    %1926 = vmatpush1.msra.mxu0 %v1691
    %1927 = vmatprep.subr.mxu0 %v1696
    %1928 = vmatpush1.msra.mxu0 %v1695
    %1929 = vmatprep.subr.mxu0 %v1700
    %1930 = vmatpush1.msra.mxu0 %v1699
    %1931 = vmatprep.subr.mxu0 %v1704
    %1932 = vmatpush1.msra.mxu0 %v1703
    %1933 = vmatprep.mubr.f32.mxu0 %v1578
    %1934 = vmatmul.mubr.f32.gmra.mrb[0].mxu0 %v1577
    %v1935 = vpop.f32.mrb[0].mxu0
    %v1936 = vadd.f32 %v1794, %v1935
    %v1937 = vpop.f32.mrb[0].mxu0
    %v1938 = vadd.f32 %v1796, %v1937
    %1939 = vdwg.mxu0
    %1940 = vmatprep.subr.mxu0 %v1582
    %1941 = vmatpush1.msra.mxu0 %v1581
    %1942 = vmatprep.subr.mxu0 %v1586
    %1943 = vmatpush1.msra.mxu0 %v1585
    %1944 = vmatprep.subr.mxu0 %v1590
    %1945 = vmatpush1.msra.mxu0 %v1589
    %1946 = vmatprep.subr.mxu0 %v1594
    %1947 = vmatpush1.msra.mxu0 %v1593
    %1948 = vmatprep.subr.mxu0 %v1598
    %1949 = vmatpush1.msra.mxu0 %v1597
    %1950 = vmatprep.subr.mxu0 %v1602
    %1951 = vmatpush1.msra.mxu0 %v1601
    %1952 = vmatprep.subr.mxu0 %v1606
    %1953 = vmatpush1.msra.mxu0 %v1605
    %1954 = vmatprep.subr.mxu0 %v1610
    %1955 = vmatpush1.msra.mxu0 %v1609
    %1956 = vmatprep.subr.mxu0 %v1614
    %1957 = vmatpush1.msra.mxu0 %v1613
    %1958 = vmatprep.subr.mxu0 %v1618
    %1959 = vmatpush1.msra.mxu0 %v1617
    %1960 = vmatprep.subr.mxu0 %v1622
    %1961 = vmatpush1.msra.mxu0 %v1621
    %1962 = vmatprep.subr.mxu0 %v1626
    %1963 = vmatpush1.msra.mxu0 %v1625
    %1964 = vmatprep.subr.mxu0 %v1630
    %1965 = vmatpush1.msra.mxu0 %v1629
    %1966 = vmatprep.subr.mxu0 %v1634
    %1967 = vmatpush1.msra.mxu0 %v1633
    %1968 = vmatprep.subr.mxu0 %v1638
    %1969 = vmatpush1.msra.mxu0 %v1637
    %1970 = vmatprep.subr.mxu0 %v1642
    %1971 = vmatpush1.msra.mxu0 %v1641
    %1972 = vmatprep.subr.mxu0 %v1646
    %1973 = vmatpush1.msra.mxu0 %v1645
    %1974 = vmatprep.subr.mxu0 %v1650
    %1975 = vmatpush1.msra.mxu0 %v1649
    %1976 = vmatprep.subr.mxu0 %v1654
    %1977 = vmatpush1.msra.mxu0 %v1653
    %1978 = vmatprep.subr.mxu0 %v1658
    %1979 = vmatpush1.msra.mxu0 %v1657
    %1980 = vmatprep.subr.mxu0 %v1662
    %1981 = vmatpush1.msra.mxu0 %v1661
    %1982 = vmatprep.subr.mxu0 %v1666
    %1983 = vmatpush1.msra.mxu0 %v1665
    %1984 = vmatprep.subr.mxu0 %v1670
    %1985 = vmatpush1.msra.mxu0 %v1669
    %1986 = vmatprep.subr.mxu0 %v1674
    %1987 = vmatpush1.msra.mxu0 %v1673
    %1988 = vmatprep.subr.mxu0 %v1678
    %1989 = vmatpush1.msra.mxu0 %v1677
    %1990 = vmatprep.subr.mxu0 %v1682
    %1991 = vmatpush1.msra.mxu0 %v1681
    %1992 = vmatprep.subr.mxu0 %v1686
    %1993 = vmatpush1.msra.mxu0 %v1685
    %1994 = vmatprep.subr.mxu0 %v1690
    %1995 = vmatpush1.msra.mxu0 %v1689
    %1996 = vmatprep.subr.mxu0 %v1694
    %1997 = vmatpush1.msra.mxu0 %v1693
    %1998 = vmatprep.subr.mxu0 %v1698
    %1999 = vmatpush1.msra.mxu0 %v1697
    %2000 = vmatprep.subr.mxu0 %v1702
    %2001 = vmatpush1.msra.mxu0 %v1701
    %2002 = vmatprep.subr.mxu0 %v1706
    %2003 = vmatpush1.msra.mxu0 %v1705
    %2004 = vmatprep.mubr.f32.mxu0 %v1578
    %2005 = vmatmul.mubr.f32.gmra.mrb[0].mxu0 %v1577
    %v2006 = vpop.f32.mrb[0].mxu0
    %v2007 = vadd.f32 %v1865, %v2006
    %v2008 = vpop.f32.mrb[0].mxu0
    %v2009 = vadd.f32 %v1867, %v2008
    %2010 = vdwg.mxu0
    %v2011 = vld [vmem:[#allocation12] sm:$0xf]
    %v2013 = vlaneseq
    %v2014 = vshrl.u32 %v2013, 7
    %v2015 = vsub.s32 0, %v2014
    %v2016 = vrot.slane %v2011, %v2015
    %v2017 = vlaneseq
    %v2018 = vshrl.u32 %v2017, 7
    %v2019 = vsub.s32 1, %v2018
    %v2020 = vrot.slane %v2011, %v2019
    %v2021 = vlaneseq
    %v2022 = vshrl.u32 %v2021, 7
    %v2023 = vsub.s32 2, %v2022
    %v2024 = vrot.slane %v2011, %v2023
    %v2025 = vlaneseq
    %v2026 = vshrl.u32 %v2025, 7
    %v2027 = vsub.s32 3, %v2026
    %v2028 = vrot.slane %v2011, %v2027
    %v2033 = vadd.f32 %v1936, %v2016
    %v2034 = vadd.f32 %v1938, %v2020
    %v2035 = vadd.f32 %v2007, %v2024
    %v2036 = vadd.f32 %v2009, %v2028
    %v2037 = vmax.f32 %v2033, 0.0
    %v2038 = vmax.f32 %v2034, 0.0
    %v2039 = vmax.f32 %v2035, 0.0
    %v2040 = vmax.f32 %v2036, 0.0
    %v2041 = vld [vmem:[#allocation13] sm:$0xff]
    %v2042 = vld [vmem:[#allocation13 + $0x8] sm:$0xff]
    %v2043 = vld [vmem:[#allocation13 + $0x10] sm:$0xff]
    %v2044 = vld [vmem:[#allocation13 + $0x18] sm:$0xff]
    %v2045 = vld [vmem:[#allocation13 + $0x20] sm:$0xff]
    %v2046 = vld [vmem:[#allocation13 + $0x28] sm:$0xff]
    %v2047 = vld [vmem:[#allocation13 + $0x30] sm:$0xff]
    %v2048 = vld [vmem:[#allocation13 + $0x38] sm:$0xff]
    %v2049 = vld [vmem:[#allocation13 + $0x40] sm:$0xff]
    %v2050 = vld [vmem:[#allocation13 + $0x48] sm:$0xff]
    %v2051 = vld [vmem:[#allocation13 + $0x50] sm:$0xff]
    %v2052 = vld [vmem:[#allocation13 + $0x58] sm:$0xff]
    %v2053 = vld [vmem:[#allocation13 + $0x60] sm:$0xff]
    %v2054 = vld [vmem:[#allocation13 + $0x68] sm:$0xff]
    %v2055 = vld [vmem:[#allocation13 + $0x70] sm:$0xff]
    %v2056 = vld [vmem:[#allocation13 + $0x78] sm:$0xff]
    %v2057 = vld [vmem:[#allocation13 + $0x80] sm:$0xff]
    %v2058 = vld [vmem:[#allocation13 + $0x88] sm:$0xff]
    %v2059 = vld [vmem:[#allocation13 + $0x90] sm:$0xff]
    %v2060 = vld [vmem:[#allocation13 + $0x98] sm:$0xff]
    %v2061 = vld [vmem:[#allocation13 + $0xa0] sm:$0xff]
    %v2062 = vld [vmem:[#allocation13 + $0xa8] sm:$0xff]
    %v2063 = vld [vmem:[#allocation13 + $0xb0] sm:$0xff]
    %v2064 = vld [vmem:[#allocation13 + $0xb8] sm:$0xff]
    %v2065 = vld [vmem:[#allocation13 + $0xc0] sm:$0xff]
    %v2066 = vld [vmem:[#allocation13 + $0xc8] sm:$0xff]
    %v2067 = vld [vmem:[#allocation13 + $0xd0] sm:$0xff]
    %v2068 = vld [vmem:[#allocation13 + $0xd8] sm:$0xff]
    %v2069 = vld [vmem:[#allocation13 + $0xe0] sm:$0xff]
    %v2070 = vld [vmem:[#allocation13 + $0xe8] sm:$0xff]
    %v2071 = vld [vmem:[#allocation13 + $0xf0] sm:$0xff]
    %v2072 = vld [vmem:[#allocation13 + $0xf8] sm:$0xff]
    %v2073 = vld [vmem:[#allocation13 + $0x100] sm:$0xff]
    %v2074 = vld [vmem:[#allocation13 + $0x108] sm:$0xff]
    %v2075 = vld [vmem:[#allocation13 + $0x110] sm:$0xff]
    %v2076 = vld [vmem:[#allocation13 + $0x118] sm:$0xff]
    %v2077 = vld [vmem:[#allocation13 + $0x120] sm:$0xff]
    %v2078 = vld [vmem:[#allocation13 + $0x128] sm:$0xff]
    %v2079 = vld [vmem:[#allocation13 + $0x130] sm:$0xff]
    %v2080 = vld [vmem:[#allocation13 + $0x138] sm:$0xff]
    %v2081 = vld [vmem:[#allocation13 + $0x140] sm:$0xff]
    %v2082 = vld [vmem:[#allocation13 + $0x148] sm:$0xff]
    %v2083 = vld [vmem:[#allocation13 + $0x150] sm:$0xff]
    %v2084 = vld [vmem:[#allocation13 + $0x158] sm:$0xff]
    %v2085 = vld [vmem:[#allocation13 + $0x160] sm:$0xff]
    %v2086 = vld [vmem:[#allocation13 + $0x168] sm:$0xff]
    %v2087 = vld [vmem:[#allocation13 + $0x170] sm:$0xff]
    %v2088 = vld [vmem:[#allocation13 + $0x178] sm:$0xff]
    %v2089 = vld [vmem:[#allocation13 + $0x180] sm:$0xff]
    %v2090 = vld [vmem:[#allocation13 + $0x188] sm:$0xff]
    %v2091 = vld [vmem:[#allocation13 + $0x190] sm:$0xff]
    %v2092 = vld [vmem:[#allocation13 + $0x198] sm:$0xff]
    %v2093 = vld [vmem:[#allocation13 + $0x1a0] sm:$0xff]
    %v2094 = vld [vmem:[#allocation13 + $0x1a8] sm:$0xff]
    %v2095 = vld [vmem:[#allocation13 + $0x1b0] sm:$0xff]
    %v2096 = vld [vmem:[#allocation13 + $0x1b8] sm:$0xff]
    %v2097 = vld [vmem:[#allocation13 + $0x1c0] sm:$0xff]
    %v2098 = vld [vmem:[#allocation13 + $0x1c8] sm:$0xff]
    %v2099 = vld [vmem:[#allocation13 + $0x1d0] sm:$0xff]
    %v2100 = vld [vmem:[#allocation13 + $0x1d8] sm:$0xff]
    %v2101 = vld [vmem:[#allocation13 + $0x1e0] sm:$0xff]
    %v2102 = vld [vmem:[#allocation13 + $0x1e8] sm:$0xff]
    %v2103 = vld [vmem:[#allocation13 + $0x1f0] sm:$0xff]
    %v2104 = vld [vmem:[#allocation13 + $0x1f8] sm:$0xff]
    %v2105 = vld [vmem:[#allocation15] sm:$0x1]
    %v2107 = vlaneseq
    %v2108 = vshrl.u32 %v2107, 7
    %v2109 = vsub.s32 0, %v2108
    %v2110 = vrot.slane %v2105, %v2109
    %2112 = vmatprep.subr.mxu0 0.0
    %2113 = vmatpush1.msra.mxu0 %v2041
    %2114 = vmatprep.subr.mxu0 0.0
    %2115 = vmatpush1.msra.mxu0 %v2042
    %2116 = vmatprep.subr.mxu0 0.0
    %2117 = vmatpush1.msra.mxu0 %v2043
    %2118 = vmatprep.subr.mxu0 0.0
    %2119 = vmatpush1.msra.mxu0 %v2044
    %2120 = vmatprep.subr.mxu0 0.0
    %2121 = vmatpush1.msra.mxu0 %v2045
    %2122 = vmatprep.subr.mxu0 0.0
    %2123 = vmatpush1.msra.mxu0 %v2046
    %2124 = vmatprep.subr.mxu0 0.0
    %2125 = vmatpush1.msra.mxu0 %v2047
    %2126 = vmatprep.subr.mxu0 0.0
    %2127 = vmatpush1.msra.mxu0 %v2048
    %2128 = vmatprep.subr.mxu0 0.0
    %2129 = vmatpush1.msra.mxu0 %v2049
    %2130 = vmatprep.subr.mxu0 0.0
    %2131 = vmatpush1.msra.mxu0 %v2050
    %2132 = vmatprep.subr.mxu0 0.0
    %2133 = vmatpush1.msra.mxu0 %v2051
    %2134 = vmatprep.subr.mxu0 0.0
    %2135 = vmatpush1.msra.mxu0 %v2052
    %2136 = vmatprep.subr.mxu0 0.0
    %2137 = vmatpush1.msra.mxu0 %v2053
    %2138 = vmatprep.subr.mxu0 0.0
    %2139 = vmatpush1.msra.mxu0 %v2054
    %2140 = vmatprep.subr.mxu0 0.0
    %2141 = vmatpush1.msra.mxu0 %v2055
    %2142 = vmatprep.subr.mxu0 0.0
    %2143 = vmatpush1.msra.mxu0 %v2056
    %2144 = vmatprep.subr.mxu0 0.0
    %2145 = vmatpush1.msra.mxu0 %v2057
    %2146 = vmatprep.subr.mxu0 0.0
    %2147 = vmatpush1.msra.mxu0 %v2058
    %2148 = vmatprep.subr.mxu0 0.0
    %2149 = vmatpush1.msra.mxu0 %v2059
    %2150 = vmatprep.subr.mxu0 0.0
    %2151 = vmatpush1.msra.mxu0 %v2060
    %2152 = vmatprep.subr.mxu0 0.0
    %2153 = vmatpush1.msra.mxu0 %v2061
    %2154 = vmatprep.subr.mxu0 0.0
    %2155 = vmatpush1.msra.mxu0 %v2062
    %2156 = vmatprep.subr.mxu0 0.0
    %2157 = vmatpush1.msra.mxu0 %v2063
    %2158 = vmatprep.subr.mxu0 0.0
    %2159 = vmatpush1.msra.mxu0 %v2064
    %2160 = vmatprep.subr.mxu0 0.0
    %2161 = vmatpush1.msra.mxu0 %v2065
    %2162 = vmatprep.subr.mxu0 0.0
    %2163 = vmatpush1.msra.mxu0 %v2066
    %2164 = vmatprep.subr.mxu0 0.0
    %2165 = vmatpush1.msra.mxu0 %v2067
    %2166 = vmatprep.subr.mxu0 0.0
    %2167 = vmatpush1.msra.mxu0 %v2068
    %2168 = vmatprep.subr.mxu0 0.0
    %2169 = vmatpush1.msra.mxu0 %v2069
    %2170 = vmatprep.subr.mxu0 0.0
    %2171 = vmatpush1.msra.mxu0 %v2070
    %2172 = vmatprep.subr.mxu0 0.0
    %2173 = vmatpush1.msra.mxu0 %v2071
    %2174 = vmatprep.subr.mxu0 0.0
    %2175 = vmatpush1.msra.mxu0 %v2072
    %2176 = vmatprep.mubr.f32.mxu0 %v2038
    %2177 = vmatmul.mubr.f32.gmra.mrb[0].mxu0 %v2037
    %v2178 = vpop.f32.mrb[0].mxu0
    %v2179 = vadd.f32 %v2110, %v2178
    %v2180 = vpop.f32.mrb[0].mxu0
    %2181 = vdwg.mxu0
    %2182 = vmatprep.subr.mxu0 0.0
    %2183 = vmatpush1.msra.mxu0 %v2073
    %2184 = vmatprep.subr.mxu0 0.0
    %2185 = vmatpush1.msra.mxu0 %v2074
    %2186 = vmatprep.subr.mxu0 0.0
    %2187 = vmatpush1.msra.mxu0 %v2075
    %2188 = vmatprep.subr.mxu0 0.0
    %2189 = vmatpush1.msra.mxu0 %v2076
    %2190 = vmatprep.subr.mxu0 0.0
    %2191 = vmatpush1.msra.mxu0 %v2077
    %2192 = vmatprep.subr.mxu0 0.0
    %2193 = vmatpush1.msra.mxu0 %v2078
    %2194 = vmatprep.subr.mxu0 0.0
    %2195 = vmatpush1.msra.mxu0 %v2079
    %2196 = vmatprep.subr.mxu0 0.0
    %2197 = vmatpush1.msra.mxu0 %v2080
    %2198 = vmatprep.subr.mxu0 0.0
    %2199 = vmatpush1.msra.mxu0 %v2081
    %2200 = vmatprep.subr.mxu0 0.0
    %2201 = vmatpush1.msra.mxu0 %v2082
    %2202 = vmatprep.subr.mxu0 0.0
    %2203 = vmatpush1.msra.mxu0 %v2083
    %2204 = vmatprep.subr.mxu0 0.0
    %2205 = vmatpush1.msra.mxu0 %v2084
    %2206 = vmatprep.subr.mxu0 0.0
    %2207 = vmatpush1.msra.mxu0 %v2085
    %2208 = vmatprep.subr.mxu0 0.0
    %2209 = vmatpush1.msra.mxu0 %v2086
    %2210 = vmatprep.subr.mxu0 0.0
    %2211 = vmatpush1.msra.mxu0 %v2087
    %2212 = vmatprep.subr.mxu0 0.0
    %2213 = vmatpush1.msra.mxu0 %v2088
    %2214 = vmatprep.subr.mxu0 0.0
    %2215 = vmatpush1.msra.mxu0 %v2089
    %2216 = vmatprep.subr.mxu0 0.0
    %2217 = vmatpush1.msra.mxu0 %v2090
    %2218 = vmatprep.subr.mxu0 0.0
    %2219 = vmatpush1.msra.mxu0 %v2091
    %2220 = vmatprep.subr.mxu0 0.0
    %2221 = vmatpush1.msra.mxu0 %v2092
    %2222 = vmatprep.subr.mxu0 0.0
    %2223 = vmatpush1.msra.mxu0 %v2093
    %2224 = vmatprep.subr.mxu0 0.0
    %2225 = vmatpush1.msra.mxu0 %v2094
    %2226 = vmatprep.subr.mxu0 0.0
    %2227 = vmatpush1.msra.mxu0 %v2095
    %2228 = vmatprep.subr.mxu0 0.0
    %2229 = vmatpush1.msra.mxu0 %v2096
    %2230 = vmatprep.subr.mxu0 0.0
    %2231 = vmatpush1.msra.mxu0 %v2097
    %2232 = vmatprep.subr.mxu0 0.0
    %2233 = vmatpush1.msra.mxu0 %v2098
    %2234 = vmatprep.subr.mxu0 0.0
    %2235 = vmatpush1.msra.mxu0 %v2099
    %2236 = vmatprep.subr.mxu0 0.0
    %2237 = vmatpush1.msra.mxu0 %v2100
    %2238 = vmatprep.subr.mxu0 0.0
    %2239 = vmatpush1.msra.mxu0 %v2101
    %2240 = vmatprep.subr.mxu0 0.0
    %2241 = vmatpush1.msra.mxu0 %v2102
    %2242 = vmatprep.subr.mxu0 0.0
    %2243 = vmatpush1.msra.mxu0 %v2103
    %2244 = vmatprep.subr.mxu0 0.0
    %2245 = vmatpush1.msra.mxu0 %v2104
    %2246 = vmatprep.mubr.f32.mxu0 %v2040
    %2247 = vmatmul.mubr.f32.gmra.mrb[0].mxu0 %v2039
    %v2248 = vpop.f32.mrb[0].mxu0
    %v2249 = vadd.f32 %v2179, %v2248
    %v2250 = vpop.f32.mrb[0].mxu0
    %2251 = vdwg.mxu0
    %v2252 = vmax.f32 %v2249, 0.0
    %v2253 = vld [vmem:[#allocation16] sm:$0xff]
    %v2254 = vld [vmem:[#allocation16 + $0x8] sm:$0xff]
    %v2255 = vld [vmem:[#allocation16 + $0x10] sm:$0xff]
    %v2256 = vld [vmem:[#allocation16 + $0x18] sm:$0xff]
    %v2257 = vld [vmem:[#allocation16 + $0x20] sm:$0xff]
    %v2258 = vld [vmem:[#allocation16 + $0x28] sm:$0xff]
    %v2259 = vld [vmem:[#allocation16 + $0x30] sm:$0xff]
    %v2260 = vld [vmem:[#allocation16 + $0x38] sm:$0xff]
    %v2261 = vld [vmem:[#allocation16 + $0x40] sm:$0xff]
    %v2262 = vld [vmem:[#allocation16 + $0x48] sm:$0xff]
    %v2263 = vld [vmem:[#allocation16 + $0x50] sm:$0xff]
    %v2264 = vld [vmem:[#allocation16 + $0x58] sm:$0xff]
    %v2265 = vld [vmem:[#allocation16 + $0x60] sm:$0xff]
    %v2266 = vld [vmem:[#allocation16 + $0x68] sm:$0xff]
    %v2267 = vld [vmem:[#allocation16 + $0x70] sm:$0xff]
    %v2268 = vld [vmem:[#allocation16 + $0x78] sm:$0xff]
    %v2269 = vld [vmem:[#allocation18] sm:$0x1]
    %v2271 = vlaneseq
    %v2272 = vshrl.u32 %v2271, 7
    %v2273 = vsub.s32 0, %v2272
    %v2274 = vrot.slane %v2269, %v2273
    %2276 = vmatprep.subr.mxu0 0.0
    %2277 = vmatpush1.msra.mxu0 %v2253
    %2278 = vmatprep.subr.mxu0 0.0
    %2279 = vmatpush1.msra.mxu0 %v2254
    %2280 = vmatprep.subr.mxu0 0.0
    %2281 = vmatpush1.msra.mxu0 %v2255
    %2282 = vmatprep.subr.mxu0 0.0
    %2283 = vmatpush1.msra.mxu0 %v2256
    %2284 = vmatprep.subr.mxu0 0.0
    %2285 = vmatpush1.msra.mxu0 %v2257
    %2286 = vmatprep.subr.mxu0 0.0
    %2287 = vmatpush1.msra.mxu0 %v2258
    %2288 = vmatprep.subr.mxu0 0.0
    %2289 = vmatpush1.msra.mxu0 %v2259
    %2290 = vmatprep.subr.mxu0 0.0
    %2291 = vmatpush1.msra.mxu0 %v2260
    %2292 = vmatprep.subr.mxu0 0.0
    %2293 = vmatpush1.msra.mxu0 %v2261
    %2294 = vmatprep.subr.mxu0 0.0
    %2295 = vmatpush1.msra.mxu0 %v2262
    %2296 = vmatprep.subr.mxu0 0.0
    %2297 = vmatpush1.msra.mxu0 %v2263
    %2298 = vmatprep.subr.mxu0 0.0
    %2299 = vmatpush1.msra.mxu0 %v2264
    %2300 = vmatprep.subr.mxu0 0.0
    %2301 = vmatpush1.msra.mxu0 %v2265
    %2302 = vmatprep.subr.mxu0 0.0
    %2303 = vmatpush1.msra.mxu0 %v2266
    %2304 = vmatprep.subr.mxu0 0.0
    %2305 = vmatpush1.msra.mxu0 %v2267
    %2306 = vmatprep.subr.mxu0 0.0
    %2307 = vmatpush1.msra.mxu0 %v2268
    %2308 = vmatprep.subr.mxu0 0.0
    %2309 = vmatpush1.msra.mxu0 0.0
    %2310 = vmatprep.subr.mxu0 0.0
    %2311 = vmatpush1.msra.mxu0 0.0
    %2312 = vmatprep.subr.mxu0 0.0
    %2313 = vmatpush1.msra.mxu0 0.0
    %2314 = vmatprep.subr.mxu0 0.0
    %2315 = vmatpush1.msra.mxu0 0.0
    %2316 = vmatprep.subr.mxu0 0.0
    %2317 = vmatpush1.msra.mxu0 0.0
    %2318 = vmatprep.subr.mxu0 0.0
    %2319 = vmatpush1.msra.mxu0 0.0
    %2320 = vmatprep.subr.mxu0 0.0
    %2321 = vmatpush1.msra.mxu0 0.0
    %2322 = vmatprep.subr.mxu0 0.0
    %2323 = vmatpush1.msra.mxu0 0.0
    %2324 = vmatprep.subr.mxu0 0.0
    %2325 = vmatpush1.msra.mxu0 0.0
    %2326 = vmatprep.subr.mxu0 0.0
    %2327 = vmatpush1.msra.mxu0 0.0
    %2328 = vmatprep.subr.mxu0 0.0
    %2329 = vmatpush1.msra.mxu0 0.0
    %2330 = vmatprep.subr.mxu0 0.0
    %2331 = vmatpush1.msra.mxu0 0.0
    %2332 = vmatprep.subr.mxu0 0.0
    %2333 = vmatpush1.msra.mxu0 0.0
    %2334 = vmatprep.subr.mxu0 0.0
    %2335 = vmatpush1.msra.mxu0 0.0
    %2336 = vmatprep.subr.mxu0 0.0
    %2337 = vmatpush1.msra.mxu0 0.0
    %2338 = vmatprep.subr.mxu0 0.0
    %2339 = vmatpush1.msra.mxu0 0.0
    %2340 = vmatprep.mubr.f32.mxu0 0.0
    %2341 = vmatmul.mubr.f32.gmra.mrb[0].mxu0 %v2252
    %v2342 = vpop.f32.mrb[0].mxu0
    %v2343 = vadd.f32 %v2274, %v2342
    %v2344 = vpop.f32.mrb[0].mxu0
    %2345 = vdwg.mxu0
    %2346 = vst [vmem:[%s13] sm:$0xff] %v2343
    // Predicated region
    $region98: #{critic_image_forward.1} parent=1 // pred_check
      _
    $region99: #{critic_image_forward.1} parent=1 // pred_check_branch
      %2348 = sbr.rel (0) target = $region101
    $region100: #{critic_image_forward.1} parent=1 // pred_region
      _
    $region101: #{critic_image_forward.1} parent=1 // pred_fallthru
      _
    // Predicated region
    $region102: #{critic_image_forward.1} parent=1 // pred_check
      _
    $region103: #{critic_image_forward.1} parent=1 // pred_check_branch
      %2350 = sbr.rel (0) target = $region105
    $region104: #{critic_image_forward.1} parent=1 // pred_region
      _
    $region105: #{critic_image_forward.1} parent=1 // pred_fallthru
      _
    %2351 = vsyncpa [#allocation3], 1
    %2352 = vsyncpa [#allocation5], 1
    %2353 = vsyncpa [#allocation8], 1
    %2354 = vsyncpa [#allocation11], 1
    %2355 = vsyncpa [#allocation14], 1
    %2356 = vsyncpa [#allocation17], 1

</llo_original>
